<compile_context>
chip_gen: v5e
topology: v5e:2x2
jax: 0.10.0
libtpu: 0.0.40
codegen_flags: <defaults>
</compile_context>

<pallas_src>
import jax
import jax.numpy as jnp
from jax.experimental import pallas as pl
from jax.experimental.pallas import tpu as pltpu

# ---------------- synthetic config dims ----------------
T = 8          # timesteps
N = 16         # total sampled nodes in the mini-batch subgraph
B = 8          # batch_size (target nodes = first B sampled nodes)
F = 16         # per-timestep feature dim
H = 32         # lstm hidden dim == config['lstm_last_ts_dim']
FLAT = 8       # static feature dim
GH = 32        # gnn hidden dim
OUT = 4        # config['out_dim']
E = 48         # number of sampled edges
OUT_PAD = 128  # lane-dense padded head width: cols [:OUT] = gnn head,
               # cols [OUT:2*OUT] = lstm head, rest zero


# ---------------- fused Pallas kernel ----------------
def fused_kernel(xf_ref, rec_ref, sage_ref, head_ref, edges_ref, ew_ref,
                 flat_ref, out_ref):
    """Adjacency build + LSTM recurrence + SAGE layer + fused heads, in VMEM."""
    f32 = jnp.float32

    # ---- 0) row-normalized weighted adjacency via one-hot MXU matmuls ----
    src = edges_ref[0:1, :]                                   # (1, E) int32
    dst = edges_ref[1:2, :]                                   # (1, E) int32
    ew = ew_ref[...]                                          # (1, E) f32
    row_b = jax.lax.broadcasted_iota(jnp.int32, (B, E), 0)
    wdst = jnp.where(row_b == dst, ew, 0.0)                   # (B, E) weighted one-hot
    row_n = jax.lax.broadcasted_iota(jnp.int32, (N, E), 0)
    srcmat = jnp.where(row_n == src, 1.0, 0.0)                # (N, E) one-hot
    a_un = jax.lax.dot_general(                               # (B, N) = sum_e
        wdst, srcmat, (((1,), (1,)), ((), ())),
        preferred_element_type=f32)
    deg = jnp.maximum(jnp.sum(a_un, axis=1, keepdims=True), 1e-6)
    a_norm = a_un / deg                                       # (B, N)

    # ---- 1) hoisted input projection: one (T*N, F) x (F, 4H) MXU matmul ----
    w_ih = rec_ref[0:F, :]                                    # (F, 4H)
    whh = rec_ref[F:F + H, :]                                 # (H, 4H)
    bias = rec_ref[F + H:F + H + 1, :]                        # (1, 4H)
    xw = jnp.dot(xf_ref[...], w_ih, preferred_element_type=f32) + bias  # (T*N, 4H)

    # ---- 2) recurrence, fully unrolled; carries live in vregs ----
    # Gate columns are pre-ordered i|f|o|g on the host, so sigmoid covers a
    # contiguous offset-0 slice and tanh only hits the g block.
    h = jnp.zeros((N, H), f32)
    c = jnp.zeros((N, H), f32)
    p_both = jnp.zeros((N, 2 * GH), f32)   # [p_self | p_neigh] accumulators
    for t in range(T):
        gates = xw[t * N:(t + 1) * N, :] + jnp.dot(
            h, whh, preferred_element_type=f32)               # (N, 4H)
        sg = jax.nn.sigmoid(gates[:, :3 * H])                 # i | f | o
        gg = jnp.tanh(gates[:, 3 * H:])                       # g
        c = sg[:, H:2 * H] * c + sg[:, :H] * gg
        h = sg[:, 2 * H:3 * H] * jnp.tanh(c)
        # SAGE projections accumulated per step (off the h-dependence chain);
        # replaces the (N, T*H) scratch + lane-offset stores.
        p_both = p_both + jnp.dot(
            h, sage_ref[t * H:(t + 1) * H, :], preferred_element_type=f32)

    last_b = h[:B, :]                                         # (B, H)
    p_self = p_both[:B, :GH]                                  # (B, GH)
    p_neigh = p_both[:, GH:]                                  # (N, GH)
    b_g = sage_ref[T * H:T * H + 1, :GH]                      # (1, GH)

    # ---- 3) SAGE layer: self transform + weighted-mean neighbor agg ----
    hg = jnp.maximum(
        p_self + jnp.dot(a_norm, p_neigh, preferred_element_type=f32) + b_g,
        0.0)                                                  # (B, GH)

    # ---- 4) both output heads fused into one lane-dense (B, 128) slab ----
    w_oh = head_ref[0:GH, :]
    w_of = head_ref[GH:GH + FLAT, :]
    w_l = head_ref[GH + FLAT:GH + FLAT + H, :]
    b_hd = head_ref[GH + FLAT + H:GH + FLAT + H + 1, :]
    z = (jnp.dot(hg, w_oh, preferred_element_type=f32)
         + jnp.dot(flat_ref[...], w_of, preferred_element_type=f32)
         + jnp.dot(last_b, w_l, preferred_element_type=f32)
         + b_hd)
    out_ref[...] = jax.nn.sigmoid(z)                          # (B, 128) unmasked store


def run_fused(xf, rec_w, sage_w, head_w, edges, ew, flat_b):
    vmem = pl.BlockSpec(memory_space=pltpu.MemorySpace.VMEM)
    return pl.pallas_call(
        fused_kernel,
        out_shape=jax.ShapeDtypeStruct((B, OUT_PAD), jnp.float32),
        in_specs=[vmem] * 7,
        out_specs=vmem,
    )(xf, rec_w, sage_w, head_w, edges, ew, flat_b)


# ---------------- one-time host-side parameter packing ----------------
def pack_params(params):
    """Pack the 12 raw parameter arrays into 3 lane-dense VMEM slabs. Run once."""
    (w_ih, w_hh, b_lstm, w_self, w_neigh, b_g,
     w_out_h, w_out_f, w_out_l, b_out, w_lo, b_lo) = params

    # reorder gate columns from PyTorch i|f|g|o to i|f|o|g
    perm = jnp.concatenate([jnp.arange(0, H), jnp.arange(H, 2 * H),
                            jnp.arange(3 * H, 4 * H), jnp.arange(2 * H, 3 * H)])
    rec_w = jnp.concatenate(
        [w_ih[:, perm], w_hh[:, perm], b_lstm[:, perm]], axis=0)   # (F+H+1, 4H)

    sage_w = jnp.concatenate(
        [jnp.concatenate([w_self, w_neigh], axis=1),
         jnp.concatenate([b_g, jnp.zeros((1, GH), jnp.float32)], axis=1)],
        axis=0)                                                    # (T*H+1, 2*GH)

    w_oh = jnp.zeros((GH, OUT_PAD), jnp.float32).at[:, :OUT].set(w_out_h)
    w_of = jnp.zeros((FLAT, OUT_PAD), jnp.float32).at[:, :OUT].set(w_out_f)
    w_l = (jnp.zeros((H, OUT_PAD), jnp.float32)
           .at[:, :OUT].set(w_out_l).at[:, OUT:2 * OUT].set(w_lo))
    b_hd = (jnp.zeros((1, OUT_PAD), jnp.float32)
            .at[:, :OUT].set(b_out).at[:, OUT:2 * OUT].set(b_lo))
    head_w = jnp.concatenate([w_oh, w_of, w_l, b_hd], axis=0)      # (GH+FLAT+H+1, 128)

    return rec_w, sage_w, head_w


# ---------------- jitted forward (one XLA program) ----------------
@jax.jit
def forward(x, flat, edge_index, edge_weight, packed):
    rec_w, sage_w, head_w = packed
    xf = x.reshape(T * N, F)                      # time-major rows: t*N + n
    flat_b = flat[:B]
    edges = edge_index.astype(jnp.int32)          # (2, E)
    ew = edge_weight.reshape(1, E).astype(jnp.float32)
    out = run_fused(xf, rec_w, sage_w, head_w, edges, ew, flat_b)
    return out[:, :OUT], out[:, OUT:2 * OUT]


# ---------------- pure-JAX reference ----------------
def build_norm_adj(edge_index, edge_weight):
    src, dst = edge_index[0], edge_index[1]
    a = jnp.zeros((B, N), jnp.float32).at[dst, src].add(edge_weight)
    deg = jnp.clip(a.sum(axis=1, keepdims=True), 1e-6, None)
    return a / deg


def forward_reference(x, flat, edge_index, edge_weight, params):
    (w_ih, w_hh, b_lstm, w_self, w_neigh, b_g,
     w_out_h, w_out_f, w_out_l, b_out, w_lo, b_lo) = params

    with jax.default_matmul_precision("highest"):
        def step(carry, x_t):
            h, c = carry
            g = x_t @ w_ih + h @ w_hh + b_lstm[0]
            i = jax.nn.sigmoid(g[:, 0 * H:1 * H])
            f = jax.nn.sigmoid(g[:, 1 * H:2 * H])
            gg = jnp.tanh(g[:, 2 * H:3 * H])
            o = jax.nn.sigmoid(g[:, 3 * H:4 * H])
            c = f * c + i * gg
            h = o * jnp.tanh(c)
            return (h, c), h

        init = (jnp.zeros((N, H), jnp.float32), jnp.zeros((N, H), jnp.float32))
        _, out_tnh = jax.lax.scan(step, init, x)
        out_nth = jnp.transpose(out_tnh, (1, 0, 2))
        last_b = out_nth[:, -1, :][:B]
        xseq = out_nth.reshape(N, T * H)
        a_norm = build_norm_adj(edge_index, edge_weight)
        agg = a_norm @ xseq
        h = jnp.maximum(xseq[:B] @ w_self + agg @ w_neigh + b_g, 0.0)
        z = h @ w_out_h + flat[:B] @ w_out_f + last_b @ w_out_l + b_out
        y = jax.nn.sigmoid(z)
        lstm_y = jax.nn.sigmoid(last_b @ w_lo + b_lo)
    return y, lstm_y


if __name__ == "__main__":
    key = jax.random.PRNGKey(0)
    ks = jax.random.split(key, 18)

    # inputs
    x = jax.random.normal(ks[0], (T, N, F), jnp.float32)        # time-major seq
    flat = jax.random.normal(ks[1], (N, FLAT), jnp.float32)     # static features
    src = jax.random.randint(ks[2], (E,), 0, N)
    dst = jax.random.randint(ks[3], (E,), 0, B)
    edge_index = jnp.stack([src, dst])                          # [2, E]
    edge_weight = jax.random.uniform(ks[4], (E,), jnp.float32, 0.1, 1.0)

    # deterministic synthetic parameters
    s = 0.1
    params = (
        s * jax.random.normal(ks[5], (F, 4 * H), jnp.float32),    # W_ih
        s * jax.random.normal(ks[6], (H, 4 * H), jnp.float32),    # W_hh
        s * jax.random.normal(ks[7], (1, 4 * H), jnp.float32),    # lstm bias
        s * jax.random.normal(ks[8], (T * H, GH), jnp.float32),   # SAGE self
        s * jax.random.normal(ks[9], (T * H, GH), jnp.float32),   # SAGE neigh
        s * jax.random.normal(ks[10], (1, GH), jnp.float32),      # SAGE bias
        s * jax.random.normal(ks[11], (GH, OUT), jnp.float32),    # out lin (h part)
        s * jax.random.normal(ks[12], (FLAT, OUT), jnp.float32),  # out lin (flat part)
        s * jax.random.normal(ks[13], (H, OUT), jnp.float32),     # out lin (last part)
        s * jax.random.normal(ks[14], (1, OUT), jnp.float32),     # out bias
        s * jax.random.normal(ks[15], (H, OUT), jnp.float32),     # self.lstm_out weight
        s * jax.random.normal(ks[16], (1, OUT), jnp.float32),     # self.lstm_out bias
    )

    # one-time packing (hoisted out of the per-call path)
    packed = pack_params(params)
    packed = jax.block_until_ready(packed)

    y, lstm_y = forward(x, flat, edge_index, edge_weight, packed)
    jax.block_until_ready((y, lstm_y))

    y_ref, lstm_y_ref = forward_reference(x, flat, edge_index, edge_weight, params)
    assert y.shape == (B, OUT) and lstm_y.shape == (B, OUT)
    assert jnp.allclose(y, y_ref, atol=1e-4, rtol=1e-4)
    assert jnp.allclose(lstm_y, lstm_y_ref, atol=1e-4, rtol=1e-4)

    print("KERNEL_OK")
</pallas_src>

<mosaic_0001>
module attributes {stable_mosaic.version = 11 : i64} {
  func.func @fused_kernel(%arg0: memref<128x16xf32, #tpu.memory_space<vmem>>, %arg1: memref<49x128xf32, #tpu.memory_space<vmem>>, %arg2: memref<257x64xf32, #tpu.memory_space<vmem>>, %arg3: memref<73x128xf32, #tpu.memory_space<vmem>>, %arg4: memref<2x48xi32, #tpu.memory_space<vmem>>, %arg5: memref<1x48xf32, #tpu.memory_space<vmem>>, %arg6: memref<8x8xf32, #tpu.memory_space<vmem>>, %arg7: memref<8x128xf32, #tpu.memory_space<vmem>>) attributes {dimension_semantics = [], scalar_prefetch = 0 : i64, scratch_operands = 0 : i64, tpu.core_type = #tpu.core_type<tc>} {
    %c0 = arith.constant 0 : index
    %c0_0 = arith.constant 0 : index
    %0 = vector.load %arg4[%c0, %c0_0] : memref<2x48xi32, #tpu.memory_space<vmem>>, vector<1x48xi32>
    %c1 = arith.constant 1 : index
    %c0_1 = arith.constant 0 : index
    %1 = vector.load %arg4[%c1, %c0_1] : memref<2x48xi32, #tpu.memory_space<vmem>>, vector<1x48xi32>
    %c0_2 = arith.constant 0 : index
    %c0_3 = arith.constant 0 : index
    %2 = vector.load %arg5[%c0_2, %c0_3] : memref<1x48xf32, #tpu.memory_space<vmem>>, vector<1x48xf32>
    %3 = tpu.iota {dimensions = array<i32: 0>} : vector<8x48xi32>
    %4 = vector.broadcast %1 : vector<1x48xi32> to vector<8x48xi32>
    %5 = arith.cmpi eq, %3, %4 : vector<8x48xi32>
    %cst = arith.constant 0.000000e+00 : f32
    %6 = vector.shape_cast %2 : vector<1x48xf32> to vector<1x48xf32>
    %7 = vector.broadcast %6 : vector<1x48xf32> to vector<8x48xf32>
    %8 = vector.broadcast %cst : f32 to vector<8x48xf32>
    %9 = arith.select %5, %7, %8 : vector<8x48xi1>, vector<8x48xf32>
    %10 = tpu.iota {dimensions = array<i32: 0>} : vector<16x48xi32>
    %11 = vector.broadcast %0 : vector<1x48xi32> to vector<16x48xi32>
    %12 = arith.cmpi eq, %10, %11 : vector<16x48xi32>
    %cst_4 = arith.constant 1.000000e+00 : f32
    %cst_5 = arith.constant 0.000000e+00 : f32
    %13 = vector.broadcast %cst_4 : f32 to vector<16x48xf32>
    %14 = vector.broadcast %cst_5 : f32 to vector<16x48xf32>
    %15 = arith.select %12, %13, %14 : vector<16x48xi1>, vector<16x48xf32>
    %cst_6 = arith.constant dense<0.000000e+00> : vector<8x16xf32>
    %16 = tpu.matmul %9, %15, %cst_6 {dimension_numbers = #tpu.dot_dimension_numbers<[1], [1], [0], [0], [0, 0, 1, 0], [], []>} : vector<8x48xf32>, vector<16x48xf32>, vector<8x16xf32> -> vector<8x16xf32>
    %cst_7 = arith.constant dense<0.000000e+00> : vector<8xf32>
    %17 = vector.multi_reduction <add>, %16, %cst_7 [1] : vector<8x16xf32> to vector<8xf32>
    %18 = vector.shape_cast %17 : vector<8xf32> to vector<8x1xf32>
    %cst_8 = arith.constant 9.99999997E-7 : f32
    %19 = vector.broadcast %cst_8 : f32 to vector<8x1xf32>
    %20 = arith.maximumf %18, %19 : vector<8x1xf32>
    %21 = vector.broadcast %20 : vector<8x1xf32> to vector<8x16xf32>
    %22 = arith.divf %16, %21 : vector<8x16xf32>
    %c0_9 = arith.constant 0 : index
    %c0_10 = arith.constant 0 : index
    %23 = vector.load %arg1[%c0_9, %c0_10] : memref<49x128xf32, #tpu.memory_space<vmem>>, vector<16x128xf32>
    %c16 = arith.constant 16 : index
    %c0_11 = arith.constant 0 : index
    %24 = vector.load %arg1[%c16, %c0_11] : memref<49x128xf32, #tpu.memory_space<vmem>>, vector<32x128xf32>
    %c48 = arith.constant 48 : index
    %c0_12 = arith.constant 0 : index
    %25 = vector.load %arg1[%c48, %c0_12] : memref<49x128xf32, #tpu.memory_space<vmem>>, vector<1x128xf32>
    %c0_13 = arith.constant 0 : index
    %c0_14 = arith.constant 0 : index
    %26 = vector.load %arg0[%c0_13, %c0_14] : memref<128x16xf32, #tpu.memory_space<vmem>>, vector<128x16xf32>
    %cst_15 = arith.constant dense<0.000000e+00> : vector<128x128xf32>
    %27 = tpu.matmul %26, %23, %cst_15 {dimension_numbers = #tpu.dot_dimension_numbers<[1], [0], [0], [1], [0, 0, 1, 1], [], []>} : vector<128x16xf32>, vector<16x128xf32>, vector<128x128xf32> -> vector<128x128xf32>
    %28 = vector.broadcast %25 : vector<1x128xf32> to vector<128x128xf32>
    %29 = arith.addf %27, %28 : vector<128x128xf32>
    %cst_16 = arith.constant 0.000000e+00 : f32
    %30 = vector.broadcast %cst_16 : f32 to vector<16x32xf32>
    %cst_17 = arith.constant 0.000000e+00 : f32
    %31 = vector.broadcast %cst_17 : f32 to vector<16x32xf32>
    %cst_18 = arith.constant 0.000000e+00 : f32
    %32 = vector.broadcast %cst_18 : f32 to vector<16x64xf32>
    %33 = vector.extract_strided_slice %29 {offsets = [0, 0], sizes = [16, 128], strides = [1, 1]} : vector<128x128xf32> to vector<16x128xf32>
    %cst_19 = arith.constant dense<0.000000e+00> : vector<16x128xf32>
    %34 = tpu.matmul %30, %24, %cst_19 {dimension_numbers = #tpu.dot_dimension_numbers<[1], [0], [0], [1], [0, 0, 1, 1], [], []>} : vector<16x32xf32>, vector<32x128xf32>, vector<16x128xf32> -> vector<16x128xf32>
    %35 = arith.addf %33, %34 : vector<16x128xf32>
    %36 = vector.extract_strided_slice %35 {offsets = [0, 0], sizes = [16, 96], strides = [1, 1]} : vector<16x128xf32> to vector<16x96xf32>
    %37 = arith.negf %36 : vector<16x96xf32>
    %38 = math.exp %37 : vector<16x96xf32>
    %cst_20 = arith.constant 1.000000e+00 : f32
    %39 = vector.broadcast %cst_20 : f32 to vector<16x96xf32>
    %40 = arith.addf %39, %38 : vector<16x96xf32>
    %41 = arith.divf %39, %40 : vector<16x96xf32>
    %42 = vector.extract_strided_slice %35 {offsets = [0, 96], sizes = [16, 32], strides = [1, 1]} : vector<16x128xf32> to vector<16x32xf32>
    %43 = math.tanh %42 : vector<16x32xf32>
    %44 = vector.extract_strided_slice %41 {offsets = [0, 32], sizes = [16, 32], strides = [1, 1]} : vector<16x96xf32> to vector<16x32xf32>
    %45 = arith.mulf %44, %31 : vector<16x32xf32>
    %46 = vector.extract_strided_slice %41 {offsets = [0, 0], sizes = [16, 32], strides = [1, 1]} : vector<16x96xf32> to vector<16x32xf32>
    %47 = arith.mulf %46, %43 : vector<16x32xf32>
    %48 = arith.addf %45, %47 : vector<16x32xf32>
    %49 = vector.extract_strided_slice %41 {offsets = [0, 64], sizes = [16, 32], strides = [1, 1]} : vector<16x96xf32> to vector<16x32xf32>
    %50 = math.tanh %48 : vector<16x32xf32>
    %51 = arith.mulf %49, %50 : vector<16x32xf32>
    %c0_21 = arith.constant 0 : index
    %c0_22 = arith.constant 0 : index
    %52 = vector.load %arg2[%c0_21, %c0_22] : memref<257x64xf32, #tpu.memory_space<vmem>>, vector<32x64xf32>
    %cst_23 = arith.constant dense<0.000000e+00> : vector<16x64xf32>
    %53 = tpu.matmul %51, %52, %cst_23 {dimension_numbers = #tpu.dot_dimension_numbers<[1], [0], [0], [1], [0, 0, 1, 1], [], []>} : vector<16x32xf32>, vector<32x64xf32>, vector<16x64xf32> -> vector<16x64xf32>
    %54 = arith.addf %32, %53 : vector<16x64xf32>
    %55 = vector.extract_strided_slice %29 {offsets = [16, 0], sizes = [16, 128], strides = [1, 1]} : vector<128x128xf32> to vector<16x128xf32>
    %cst_24 = arith.constant dense<0.000000e+00> : vector<16x128xf32>
    %56 = tpu.matmul %51, %24, %cst_24 {dimension_numbers = #tpu.dot_dimension_numbers<[1], [0], [0], [1], [0, 0, 1, 1], [], []>} : vector<16x32xf32>, vector<32x128xf32>, vector<16x128xf32> -> vector<16x128xf32>
    %57 = arith.addf %55, %56 : vector<16x128xf32>
    %58 = vector.extract_strided_slice %57 {offsets = [0, 0], sizes = [16, 96], strides = [1, 1]} : vector<16x128xf32> to vector<16x96xf32>
    %59 = arith.negf %58 : vector<16x96xf32>
    %60 = math.exp %59 : vector<16x96xf32>
    %cst_25 = arith.constant 1.000000e+00 : f32
    %61 = vector.broadcast %cst_25 : f32 to vector<16x96xf32>
    %62 = arith.addf %61, %60 : vector<16x96xf32>
    %63 = arith.divf %61, %62 : vector<16x96xf32>
    %64 = vector.extract_strided_slice %57 {offsets = [0, 96], sizes = [16, 32], strides = [1, 1]} : vector<16x128xf32> to vector<16x32xf32>
    %65 = math.tanh %64 : vector<16x32xf32>
    %66 = vector.extract_strided_slice %63 {offsets = [0, 32], sizes = [16, 32], strides = [1, 1]} : vector<16x96xf32> to vector<16x32xf32>
    %67 = arith.mulf %66, %48 : vector<16x32xf32>
    %68 = vector.extract_strided_slice %63 {offsets = [0, 0], sizes = [16, 32], strides = [1, 1]} : vector<16x96xf32> to vector<16x32xf32>
    %69 = arith.mulf %68, %65 : vector<16x32xf32>
    %70 = arith.addf %67, %69 : vector<16x32xf32>
    %71 = vector.extract_strided_slice %63 {offsets = [0, 64], sizes = [16, 32], strides = [1, 1]} : vector<16x96xf32> to vector<16x32xf32>
    %72 = math.tanh %70 : vector<16x32xf32>
    %73 = arith.mulf %71, %72 : vector<16x32xf32>
    %c32 = arith.constant 32 : index
    %c0_26 = arith.constant 0 : index
    %74 = vector.load %arg2[%c32, %c0_26] : memref<257x64xf32, #tpu.memory_space<vmem>>, vector<32x64xf32>
    %cst_27 = arith.constant dense<0.000000e+00> : vector<16x64xf32>
    %75 = tpu.matmul %73, %74, %cst_27 {dimension_numbers = #tpu.dot_dimension_numbers<[1], [0], [0], [1], [0, 0, 1, 1], [], []>} : vector<16x32xf32>, vector<32x64xf32>, vector<16x64xf32> -> vector<16x64xf32>
    %76 = arith.addf %54, %75 : vector<16x64xf32>
    %77 = vector.extract_strided_slice %29 {offsets = [32, 0], sizes = [16, 128], strides = [1, 1]} : vector<128x128xf32> to vector<16x128xf32>
    %cst_28 = arith.constant dense<0.000000e+00> : vector<16x128xf32>
    %78 = tpu.matmul %73, %24, %cst_28 {dimension_numbers = #tpu.dot_dimension_numbers<[1], [0], [0], [1], [0, 0, 1, 1], [], []>} : vector<16x32xf32>, vector<32x128xf32>, vector<16x128xf32> -> vector<16x128xf32>
    %79 = arith.addf %77, %78 : vector<16x128xf32>
    %80 = vector.extract_strided_slice %79 {offsets = [0, 0], sizes = [16, 96], strides = [1, 1]} : vector<16x128xf32> to vector<16x96xf32>
    %81 = arith.negf %80 : vector<16x96xf32>
    %82 = math.exp %81 : vector<16x96xf32>
    %cst_29 = arith.constant 1.000000e+00 : f32
    %83 = vector.broadcast %cst_29 : f32 to vector<16x96xf32>
    %84 = arith.addf %83, %82 : vector<16x96xf32>
    %85 = arith.divf %83, %84 : vector<16x96xf32>
    %86 = vector.extract_strided_slice %79 {offsets = [0, 96], sizes = [16, 32], strides = [1, 1]} : vector<16x128xf32> to vector<16x32xf32>
    %87 = math.tanh %86 : vector<16x32xf32>
    %88 = vector.extract_strided_slice %85 {offsets = [0, 32], sizes = [16, 32], strides = [1, 1]} : vector<16x96xf32> to vector<16x32xf32>
    %89 = arith.mulf %88, %70 : vector<16x32xf32>
    %90 = vector.extract_strided_slice %85 {offsets = [0, 0], sizes = [16, 32], strides = [1, 1]} : vector<16x96xf32> to vector<16x32xf32>
    %91 = arith.mulf %90, %87 : vector<16x32xf32>
    %92 = arith.addf %89, %91 : vector<16x32xf32>
    %93 = vector.extract_strided_slice %85 {offsets = [0, 64], sizes = [16, 32], strides = [1, 1]} : vector<16x96xf32> to vector<16x32xf32>
    %94 = math.tanh %92 : vector<16x32xf32>
    %95 = arith.mulf %93, %94 : vector<16x32xf32>
    %c64 = arith.constant 64 : index
    %c0_30 = arith.constant 0 : index
    %96 = vector.load %arg2[%c64, %c0_30] : memref<257x64xf32, #tpu.memory_space<vmem>>, vector<32x64xf32>
    %cst_31 = arith.constant dense<0.000000e+00> : vector<16x64xf32>
    %97 = tpu.matmul %95, %96, %cst_31 {dimension_numbers = #tpu.dot_dimension_numbers<[1], [0], [0], [1], [0, 0, 1, 1], [], []>} : vector<16x32xf32>, vector<32x64xf32>, vector<16x64xf32> -> vector<16x64xf32>
    %98 = arith.addf %76, %97 : vector<16x64xf32>
    %99 = vector.extract_strided_slice %29 {offsets = [48, 0], sizes = [16, 128], strides = [1, 1]} : vector<128x128xf32> to vector<16x128xf32>
    %cst_32 = arith.constant dense<0.000000e+00> : vector<16x128xf32>
    %100 = tpu.matmul %95, %24, %cst_32 {dimension_numbers = #tpu.dot_dimension_numbers<[1], [0], [0], [1], [0, 0, 1, 1], [], []>} : vector<16x32xf32>, vector<32x128xf32>, vector<16x128xf32> -> vector<16x128xf32>
    %101 = arith.addf %99, %100 : vector<16x128xf32>
    %102 = vector.extract_strided_slice %101 {offsets = [0, 0], sizes = [16, 96], strides = [1, 1]} : vector<16x128xf32> to vector<16x96xf32>
    %103 = arith.negf %102 : vector<16x96xf32>
    %104 = math.exp %103 : vector<16x96xf32>
    %cst_33 = arith.constant 1.000000e+00 : f32
    %105 = vector.broadcast %cst_33 : f32 to vector<16x96xf32>
    %106 = arith.addf %105, %104 : vector<16x96xf32>
    %107 = arith.divf %105, %106 : vector<16x96xf32>
    %108 = vector.extract_strided_slice %101 {offsets = [0, 96], sizes = [16, 32], strides = [1, 1]} : vector<16x128xf32> to vector<16x32xf32>
    %109 = math.tanh %108 : vector<16x32xf32>
    %110 = vector.extract_strided_slice %107 {offsets = [0, 32], sizes = [16, 32], strides = [1, 1]} : vector<16x96xf32> to vector<16x32xf32>
    %111 = arith.mulf %110, %92 : vector<16x32xf32>
    %112 = vector.extract_strided_slice %107 {offsets = [0, 0], sizes = [16, 32], strides = [1, 1]} : vector<16x96xf32> to vector<16x32xf32>
    %113 = arith.mulf %112, %109 : vector<16x32xf32>
    %114 = arith.addf %111, %113 : vector<16x32xf32>
    %115 = vector.extract_strided_slice %107 {offsets = [0, 64], sizes = [16, 32], strides = [1, 1]} : vector<16x96xf32> to vector<16x32xf32>
    %116 = math.tanh %114 : vector<16x32xf32>
    %117 = arith.mulf %115, %116 : vector<16x32xf32>
    %c96 = arith.constant 96 : index
    %c0_34 = arith.constant 0 : index
    %118 = vector.load %arg2[%c96, %c0_34] : memref<257x64xf32, #tpu.memory_space<vmem>>, vector<32x64xf32>
    %cst_35 = arith.constant dense<0.000000e+00> : vector<16x64xf32>
    %119 = tpu.matmul %117, %118, %cst_35 {dimension_numbers = #tpu.dot_dimension_numbers<[1], [0], [0], [1], [0, 0, 1, 1], [], []>} : vector<16x32xf32>, vector<32x64xf32>, vector<16x64xf32> -> vector<16x64xf32>
    %120 = arith.addf %98, %119 : vector<16x64xf32>
    %121 = vector.extract_strided_slice %29 {offsets = [64, 0], sizes = [16, 128], strides = [1, 1]} : vector<128x128xf32> to vector<16x128xf32>
    %cst_36 = arith.constant dense<0.000000e+00> : vector<16x128xf32>
    %122 = tpu.matmul %117, %24, %cst_36 {dimension_numbers = #tpu.dot_dimension_numbers<[1], [0], [0], [1], [0, 0, 1, 1], [], []>} : vector<16x32xf32>, vector<32x128xf32>, vector<16x128xf32> -> vector<16x128xf32>
    %123 = arith.addf %121, %122 : vector<16x128xf32>
    %124 = vector.extract_strided_slice %123 {offsets = [0, 0], sizes = [16, 96], strides = [1, 1]} : vector<16x128xf32> to vector<16x96xf32>
    %125 = arith.negf %124 : vector<16x96xf32>
    %126 = math.exp %125 : vector<16x96xf32>
    %cst_37 = arith.constant 1.000000e+00 : f32
    %127 = vector.broadcast %cst_37 : f32 to vector<16x96xf32>
    %128 = arith.addf %127, %126 : vector<16x96xf32>
    %129 = arith.divf %127, %128 : vector<16x96xf32>
    %130 = vector.extract_strided_slice %123 {offsets = [0, 96], sizes = [16, 32], strides = [1, 1]} : vector<16x128xf32> to vector<16x32xf32>
    %131 = math.tanh %130 : vector<16x32xf32>
    %132 = vector.extract_strided_slice %129 {offsets = [0, 32], sizes = [16, 32], strides = [1, 1]} : vector<16x96xf32> to vector<16x32xf32>
    %133 = arith.mulf %132, %114 : vector<16x32xf32>
    %134 = vector.extract_strided_slice %129 {offsets = [0, 0], sizes = [16, 32], strides = [1, 1]} : vector<16x96xf32> to vector<16x32xf32>
    %135 = arith.mulf %134, %131 : vector<16x32xf32>
    %136 = arith.addf %133, %135 : vector<16x32xf32>
    %137 = vector.extract_strided_slice %129 {offsets = [0, 64], sizes = [16, 32], strides = [1, 1]} : vector<16x96xf32> to vector<16x32xf32>
    %138 = math.tanh %136 : vector<16x32xf32>
    %139 = arith.mulf %137, %138 : vector<16x32xf32>
    %c128 = arith.constant 128 : index
    %c0_38 = arith.constant 0 : index
    %140 = vector.load %arg2[%c128, %c0_38] : memref<257x64xf32, #tpu.memory_space<vmem>>, vector<32x64xf32>
    %cst_39 = arith.constant dense<0.000000e+00> : vector<16x64xf32>
    %141 = tpu.matmul %139, %140, %cst_39 {dimension_numbers = #tpu.dot_dimension_numbers<[1], [0], [0], [1], [0, 0, 1, 1], [], []>} : vector<16x32xf32>, vector<32x64xf32>, vector<16x64xf32> -> vector<16x64xf32>
    %142 = arith.addf %120, %141 : vector<16x64xf32>
    %143 = vector.extract_strided_slice %29 {offsets = [80, 0], sizes = [16, 128], strides = [1, 1]} : vector<128x128xf32> to vector<16x128xf32>
    %cst_40 = arith.constant dense<0.000000e+00> : vector<16x128xf32>
    %144 = tpu.matmul %139, %24, %cst_40 {dimension_numbers = #tpu.dot_dimension_numbers<[1], [0], [0], [1], [0, 0, 1, 1], [], []>} : vector<16x32xf32>, vector<32x128xf32>, vector<16x128xf32> -> vector<16x128xf32>
    %145 = arith.addf %143, %144 : vector<16x128xf32>
    %146 = vector.extract_strided_slice %145 {offsets = [0, 0], sizes = [16, 96], strides = [1, 1]} : vector<16x128xf32> to vector<16x96xf32>
    %147 = arith.negf %146 : vector<16x96xf32>
    %148 = math.exp %147 : vector<16x96xf32>
    %cst_41 = arith.constant 1.000000e+00 : f32
    %149 = vector.broadcast %cst_41 : f32 to vector<16x96xf32>
    %150 = arith.addf %149, %148 : vector<16x96xf32>
    %151 = arith.divf %149, %150 : vector<16x96xf32>
    %152 = vector.extract_strided_slice %145 {offsets = [0, 96], sizes = [16, 32], strides = [1, 1]} : vector<16x128xf32> to vector<16x32xf32>
    %153 = math.tanh %152 : vector<16x32xf32>
    %154 = vector.extract_strided_slice %151 {offsets = [0, 32], sizes = [16, 32], strides = [1, 1]} : vector<16x96xf32> to vector<16x32xf32>
    %155 = arith.mulf %154, %136 : vector<16x32xf32>
    %156 = vector.extract_strided_slice %151 {offsets = [0, 0], sizes = [16, 32], strides = [1, 1]} : vector<16x96xf32> to vector<16x32xf32>
    %157 = arith.mulf %156, %153 : vector<16x32xf32>
    %158 = arith.addf %155, %157 : vector<16x32xf32>
    %159 = vector.extract_strided_slice %151 {offsets = [0, 64], sizes = [16, 32], strides = [1, 1]} : vector<16x96xf32> to vector<16x32xf32>
    %160 = math.tanh %158 : vector<16x32xf32>
    %161 = arith.mulf %159, %160 : vector<16x32xf32>
    %c160 = arith.constant 160 : index
    %c0_42 = arith.constant 0 : index
    %162 = vector.load %arg2[%c160, %c0_42] : memref<257x64xf32, #tpu.memory_space<vmem>>, vector<32x64xf32>
    %cst_43 = arith.constant dense<0.000000e+00> : vector<16x64xf32>
    %163 = tpu.matmul %161, %162, %cst_43 {dimension_numbers = #tpu.dot_dimension_numbers<[1], [0], [0], [1], [0, 0, 1, 1], [], []>} : vector<16x32xf32>, vector<32x64xf32>, vector<16x64xf32> -> vector<16x64xf32>
    %164 = arith.addf %142, %163 : vector<16x64xf32>
    %165 = vector.extract_strided_slice %29 {offsets = [96, 0], sizes = [16, 128], strides = [1, 1]} : vector<128x128xf32> to vector<16x128xf32>
    %cst_44 = arith.constant dense<0.000000e+00> : vector<16x128xf32>
    %166 = tpu.matmul %161, %24, %cst_44 {dimension_numbers = #tpu.dot_dimension_numbers<[1], [0], [0], [1], [0, 0, 1, 1], [], []>} : vector<16x32xf32>, vector<32x128xf32>, vector<16x128xf32> -> vector<16x128xf32>
    %167 = arith.addf %165, %166 : vector<16x128xf32>
    %168 = vector.extract_strided_slice %167 {offsets = [0, 0], sizes = [16, 96], strides = [1, 1]} : vector<16x128xf32> to vector<16x96xf32>
    %169 = arith.negf %168 : vector<16x96xf32>
    %170 = math.exp %169 : vector<16x96xf32>
    %cst_45 = arith.constant 1.000000e+00 : f32
    %171 = vector.broadcast %cst_45 : f32 to vector<16x96xf32>
    %172 = arith.addf %171, %170 : vector<16x96xf32>
    %173 = arith.divf %171, %172 : vector<16x96xf32>
    %174 = vector.extract_strided_slice %167 {offsets = [0, 96], sizes = [16, 32], strides = [1, 1]} : vector<16x128xf32> to vector<16x32xf32>
    %175 = math.tanh %174 : vector<16x32xf32>
    %176 = vector.extract_strided_slice %173 {offsets = [0, 32], sizes = [16, 32], strides = [1, 1]} : vector<16x96xf32> to vector<16x32xf32>
    %177 = arith.mulf %176, %158 : vector<16x32xf32>
    %178 = vector.extract_strided_slice %173 {offsets = [0, 0], sizes = [16, 32], strides = [1, 1]} : vector<16x96xf32> to vector<16x32xf32>
    %179 = arith.mulf %178, %175 : vector<16x32xf32>
    %180 = arith.addf %177, %179 : vector<16x32xf32>
    %181 = vector.extract_strided_slice %173 {offsets = [0, 64], sizes = [16, 32], strides = [1, 1]} : vector<16x96xf32> to vector<16x32xf32>
    %182 = math.tanh %180 : vector<16x32xf32>
    %183 = arith.mulf %181, %182 : vector<16x32xf32>
    %c192 = arith.constant 192 : index
    %c0_46 = arith.constant 0 : index
    %184 = vector.load %arg2[%c192, %c0_46] : memref<257x64xf32, #tpu.memory_space<vmem>>, vector<32x64xf32>
    %cst_47 = arith.constant dense<0.000000e+00> : vector<16x64xf32>
    %185 = tpu.matmul %183, %184, %cst_47 {dimension_numbers = #tpu.dot_dimension_numbers<[1], [0], [0], [1], [0, 0, 1, 1], [], []>} : vector<16x32xf32>, vector<32x64xf32>, vector<16x64xf32> -> vector<16x64xf32>
    %186 = arith.addf %164, %185 : vector<16x64xf32>
    %187 = vector.extract_strided_slice %29 {offsets = [112, 0], sizes = [16, 128], strides = [1, 1]} : vector<128x128xf32> to vector<16x128xf32>
    %cst_48 = arith.constant dense<0.000000e+00> : vector<16x128xf32>
    %188 = tpu.matmul %183, %24, %cst_48 {dimension_numbers = #tpu.dot_dimension_numbers<[1], [0], [0], [1], [0, 0, 1, 1], [], []>} : vector<16x32xf32>, vector<32x128xf32>, vector<16x128xf32> -> vector<16x128xf32>
    %189 = arith.addf %187, %188 : vector<16x128xf32>
    %190 = vector.extract_strided_slice %189 {offsets = [0, 0], sizes = [16, 96], strides = [1, 1]} : vector<16x128xf32> to vector<16x96xf32>
    %191 = arith.negf %190 : vector<16x96xf32>
    %192 = math.exp %191 : vector<16x96xf32>
    %cst_49 = arith.constant 1.000000e+00 : f32
    %193 = vector.broadcast %cst_49 : f32 to vector<16x96xf32>
    %194 = arith.addf %193, %192 : vector<16x96xf32>
    %195 = arith.divf %193, %194 : vector<16x96xf32>
    %196 = vector.extract_strided_slice %189 {offsets = [0, 96], sizes = [16, 32], strides = [1, 1]} : vector<16x128xf32> to vector<16x32xf32>
    %197 = math.tanh %196 : vector<16x32xf32>
    %198 = vector.extract_strided_slice %195 {offsets = [0, 32], sizes = [16, 32], strides = [1, 1]} : vector<16x96xf32> to vector<16x32xf32>
    %199 = arith.mulf %198, %180 : vector<16x32xf32>
    %200 = vector.extract_strided_slice %195 {offsets = [0, 0], sizes = [16, 32], strides = [1, 1]} : vector<16x96xf32> to vector<16x32xf32>
    %201 = arith.mulf %200, %197 : vector<16x32xf32>
    %202 = arith.addf %199, %201 : vector<16x32xf32>
    %203 = vector.extract_strided_slice %195 {offsets = [0, 64], sizes = [16, 32], strides = [1, 1]} : vector<16x96xf32> to vector<16x32xf32>
    %204 = math.tanh %202 : vector<16x32xf32>
    %205 = arith.mulf %203, %204 : vector<16x32xf32>
    %c224 = arith.constant 224 : index
    %c0_50 = arith.constant 0 : index
    %206 = vector.load %arg2[%c224, %c0_50] : memref<257x64xf32, #tpu.memory_space<vmem>>, vector<32x64xf32>
    %cst_51 = arith.constant dense<0.000000e+00> : vector<16x64xf32>
    %207 = tpu.matmul %205, %206, %cst_51 {dimension_numbers = #tpu.dot_dimension_numbers<[1], [0], [0], [1], [0, 0, 1, 1], [], []>} : vector<16x32xf32>, vector<32x64xf32>, vector<16x64xf32> -> vector<16x64xf32>
    %208 = arith.addf %186, %207 : vector<16x64xf32>
    %209 = vector.extract_strided_slice %205 {offsets = [0, 0], sizes = [8, 32], strides = [1, 1]} : vector<16x32xf32> to vector<8x32xf32>
    %210 = vector.extract_strided_slice %208 {offsets = [0, 0], sizes = [8, 32], strides = [1, 1]} : vector<16x64xf32> to vector<8x32xf32>
    %211 = vector.extract_strided_slice %208 {offsets = [0, 32], sizes = [16, 32], strides = [1, 1]} : vector<16x64xf32> to vector<16x32xf32>
    %c256 = arith.constant 256 : index
    %c0_52 = arith.constant 0 : index
    %212 = vector.load %arg2[%c256, %c0_52] : memref<257x64xf32, #tpu.memory_space<vmem>>, vector<1x32xf32>
    %cst_53 = arith.constant dense<0.000000e+00> : vector<8x32xf32>
    %213 = tpu.matmul %22, %211, %cst_53 {dimension_numbers = #tpu.dot_dimension_numbers<[1], [0], [0], [1], [0, 0, 1, 1], [], []>} : vector<8x16xf32>, vector<16x32xf32>, vector<8x32xf32> -> vector<8x32xf32>
    %214 = arith.addf %210, %213 : vector<8x32xf32>
    %215 = vector.broadcast %212 : vector<1x32xf32> to vector<8x32xf32>
    %216 = arith.addf %214, %215 : vector<8x32xf32>
    %cst_54 = arith.constant 0.000000e+00 : f32
    %217 = vector.broadcast %cst_54 : f32 to vector<8x32xf32>
    %218 = arith.maximumf %216, %217 : vector<8x32xf32>
    %c0_55 = arith.constant 0 : index
    %c0_56 = arith.constant 0 : index
    %219 = vector.load %arg3[%c0_55, %c0_56] : memref<73x128xf32, #tpu.memory_space<vmem>>, vector<32x128xf32>
    %c32_57 = arith.constant 32 : index
    %c0_58 = arith.constant 0 : index
    %220 = vector.load %arg3[%c32_57, %c0_58] : memref<73x128xf32, #tpu.memory_space<vmem>>, vector<8x128xf32>
    %c40 = arith.constant 40 : index
    %c0_59 = arith.constant 0 : index
    %221 = vector.load %arg3[%c40, %c0_59] : memref<73x128xf32, #tpu.memory_space<vmem>>, vector<32x128xf32>
    %c72 = arith.constant 72 : index
    %c0_60 = arith.constant 0 : index
    %222 = vector.load %arg3[%c72, %c0_60] : memref<73x128xf32, #tpu.memory_space<vmem>>, vector<1x128xf32>
    %cst_61 = arith.constant dense<0.000000e+00> : vector<8x128xf32>
    %223 = tpu.matmul %218, %219, %cst_61 {dimension_numbers = #tpu.dot_dimension_numbers<[1], [0], [0], [1], [0, 0, 1, 1], [], []>} : vector<8x32xf32>, vector<32x128xf32>, vector<8x128xf32> -> vector<8x128xf32>
    %c0_62 = arith.constant 0 : index
    %c0_63 = arith.constant 0 : index
    %224 = vector.load %arg6[%c0_62, %c0_63] : memref<8x8xf32, #tpu.memory_space<vmem>>, vector<8x8xf32>
    %cst_64 = arith.constant dense<0.000000e+00> : vector<8x128xf32>
    %225 = tpu.matmul %224, %220, %cst_64 {dimension_numbers = #tpu.dot_dimension_numbers<[1], [0], [0], [1], [0, 0, 1, 1], [], []>} : vector<8x8xf32>, vector<8x128xf32>, vector<8x128xf32> -> vector<8x128xf32>
    %226 = arith.addf %223, %225 : vector<8x128xf32>
    %cst_65 = arith.constant dense<0.000000e+00> : vector<8x128xf32>
    %227 = tpu.matmul %209, %221, %cst_65 {dimension_numbers = #tpu.dot_dimension_numbers<[1], [0], [0], [1], [0, 0, 1, 1], [], []>} : vector<8x32xf32>, vector<32x128xf32>, vector<8x128xf32> -> vector<8x128xf32>
    %228 = arith.addf %226, %227 : vector<8x128xf32>
    %229 = vector.broadcast %222 : vector<1x128xf32> to vector<8x128xf32>
    %230 = arith.addf %228, %229 : vector<8x128xf32>
    %231 = arith.negf %230 : vector<8x128xf32>
    %232 = math.exp %231 : vector<8x128xf32>
    %cst_66 = arith.constant 1.000000e+00 : f32
    %233 = vector.broadcast %cst_66 : f32 to vector<8x128xf32>
    %234 = arith.addf %233, %232 : vector<8x128xf32>
    %235 = arith.divf %233, %234 : vector<8x128xf32>
    %c0_67 = arith.constant 0 : index
    %c0_68 = arith.constant 0 : index
    %236 = vector.load %arg7[%c0_67, %c0_68] : memref<8x128xf32, #tpu.memory_space<vmem>>, vector<8x128xf32>
    tpu.vector_store %arg7[%c0_67, %c0_68], %235 {strides = array<i32>} : memref<8x128xf32, #tpu.memory_space<vmem>>, vector<8x128xf32>,
    return
  }
}

</mosaic_0001>

<llo_original>
// kernel: forward.1
$region0: #{forward.1}
  #allocation0 [shape = 'u32[]', space=smem, size = 0x4, offset = 0x4, fixed_abs, tag = 'smem constant byte address 0x4 - core index']
  #allocation1 [shape = 'u32[72,128]{1,0:T(1,128)}', space=vmem, size = 0x9000, scoped, tag = 'internal scratch']
  %s0 = inlined_call_operand.vmem [shape: f32[128,16], index: 0, kind: input, shape index: {}]
  %s1 = inlined_call_operand.vmem [shape: f32[49,128], index: 1, kind: input, shape index: {}]
  %s2 = inlined_call_operand.vmem [shape: f32[257,64], index: 2, kind: input, shape index: {}]
  %s3 = inlined_call_operand.vmem [shape: f32[73,128], index: 3, kind: input, shape index: {}]
  %s4 = inlined_call_operand.vmem [shape: s32[2,48], index: 4, kind: input, shape index: {}]
  %s5 = inlined_call_operand.vmem [shape: f32[1,48], index: 5, kind: input, shape index: {}]
  %s6 = inlined_call_operand.vmem [shape: f32[8,8], index: 6, kind: input, shape index: {}]
  %s7 = inlined_call_operand.vmem [shape: f32[8,128], index: 7, kind: output, shape index: {}]
  %s8 = sld [smem:[#allocation0]]
  $region38: #{forward.1} parent=0
    _
  %s10 = ssub.s32 1, %s8
  %s11 = scalar_select 0, %s10, %s8
  // Predicated region
  $region2: #{forward.1} parent=0 // pred_check
    _
  $region3: #{forward.1} parent=0 // pred_check_branch
    %13 = sbr.rel (0) target = $region5
  $region4: #{forward.1} parent=0 // pred_region
    _
  $region5: #{forward.1} parent=0 // pred_fallthru
    _
  // Predicated region
  $region6: #{forward.1} parent=0 // pred_check
    _
  $region7: #{forward.1} parent=0 // pred_check_branch
    %15 = sbr.rel (0) target = $region9
  $region8: #{forward.1} parent=0 // pred_region
    _
  $region9: #{forward.1} parent=0 // pred_fallthru
    _
  // Predicated region
  $region10: #{forward.1} parent=0 // pred_check
    _
  $region11: #{forward.1} parent=0 // pred_check_branch
    %17 = sbr.rel (0) target = $region13
  $region12: #{forward.1} parent=0 // pred_region
    _
  $region13: #{forward.1} parent=0 // pred_fallthru
    _
  // Predicated region
  $region14: #{forward.1} parent=0 // pred_check
    _
  $region15: #{forward.1} parent=0 // pred_check_branch
    %19 = sbr.rel (0) target = $region17
  $region16: #{forward.1} parent=0 // pred_region
    _
  $region17: #{forward.1} parent=0 // pred_fallthru
    _
  // Predicated region
  $region18: #{forward.1} parent=0 // pred_check
    _
  $region19: #{forward.1} parent=0 // pred_check_branch
    %21 = sbr.rel (0) target = $region21
  $region20: #{forward.1} parent=0 // pred_region
    _
  $region21: #{forward.1} parent=0 // pred_fallthru
    _
  // Predicated region
  $region22: #{forward.1} parent=0 // pred_check
    _
  $region23: #{forward.1} parent=0 // pred_check_branch
    %23 = sbr.rel (0) target = $region25
  $region24: #{forward.1} parent=0 // pred_region
    _
  $region25: #{forward.1} parent=0 // pred_fallthru
    _
  // Predicated region
  $region26: #{forward.1} parent=0 // pred_check
    _
  $region27: #{forward.1} parent=0 // pred_check_branch
    %25 = sbr.rel (0) target = $region29
  $region28: #{forward.1} parent=0 // pred_region
    _
  $region29: #{forward.1} parent=0 // pred_fallthru
    _
  %v26 = vld [vmem:[%s4] sm:$0x1]
  %v27 = vld [vmem:[%s4 + $0x1] sm:$0x1]
  %v28 = vld [vmem:[%s5] sm:$0x1]
  %v29 = vlaneseq
  %v30 = vshrl.u32 %v29, 7
  %v31 = vperm.slane %v27, 0
  %vm32 = vcmp.eq.s32.totalorder %v30, %v31
  %v34 = vperm.slane %v28, 0
  %v36 = vsel %vm32, %v34, 0.0
  %v37 = vadd.s32 %v30, 8
  %v38 = vperm.slane %v26, 0
  %vm39 = vcmp.eq.s32.totalorder %v30, %v38
  %vm40 = vcmp.eq.s32.totalorder %v37, %v38
  %v41 = vsel %vm39, 1.0, 0.0
  %v42 = vsel %vm40, 1.0, 0.0
  %vm43 = vcmask 392192
  %v45 = vsel %vm43, %v36, 0
  %v48 = vsel %vm43, %v41, 0
  %v51 = vsel %vm43, %v42, 0
  %53 = vmatpush.xpose.msra.mxu0 0.0
  %54 = vmatpush.xpose.msra.mxu0 0.0
  %55 = vmatpush.xpose.msra.mxu0 0.0
  %56 = vmatpush.xpose.msra.mxu0 0.0
  %57 = vmatpush.xpose.msra.mxu0 0.0
  %58 = vmatpush.xpose.msra.mxu0 0.0
  %59 = vmatpush.xpose.msra.mxu0 0.0
  %60 = vmatpush.xpose.msra.mxu0 0.0
  %61 = vmatpush.xpose.msra.mxu0 0.0
  %62 = vmatpush.xpose.msra.mxu0 0.0
  %63 = vmatpush.xpose.msra.mxu0 0.0
  %64 = vmatpush.xpose.msra.mxu0 0.0
  %65 = vmatpush.xpose.msra.mxu0 0.0
  %66 = vmatpush.xpose.msra.mxu0 0.0
  %67 = vmatpush.xpose.msra.mxu0 %v51
  %68 = vmatpush.xpose.msra.mxu0 %v48
  %69 = vmatmul.f32.gmra.mxu0 %v45
  %v70 = vpop.f32.mrf.mxu0
  %v71 = vadd.f32 0.0, %v70
  %72 = vdwg.mxu0
  %vm73 = vcmask 130048
  %v74 = vsel %vm73, %v71, 0.0
  %75 = vadd.xlane.f32.xlu0 %v74
  %v76 = vpop.xlane.xlu0 %75
  %v77 = vmax.f32 %v76, 1e-06
  %v78 = vrcp.pop %v77
  %v79 = vmul.f32 %v77, %v78
  %v80 = vsub.f32 1.0, %v79
  %v81 = vmul.f32 %v78, %v80
  %v82 = vadd.f32 %v78, %v81
  %vm83 = vweird.f32 %v77
  %vm84 = vweird.f32 %v78
  %vm85 = vmor %vm83, %vm84
  %v86 = vsel %vm85, %v78, %v82
  %v87 = vand.u32 2147483647, %v77
  %vm88 = vcmp.eq.f32.partialorder %v87, 8.507059e+37
  %v89 = vand.u32 %v77, 2147483648
  %v90 = vor.u32 1.1754944e-38, %v89
  %v91 = vsel %vm88, %v90, %v86
  %v92 = vmul.f32 %v71, %v91
  %v93 = vld [vmem:[%s1] sm:$0xff]
  %v94 = vld [vmem:[%s1 + $0x8] sm:$0xff]
  %v95 = vld [vmem:[%s1 + $0x10] sm:$0xff]
  %v96 = vld [vmem:[%s1 + $0x18] sm:$0xff]
  %v97 = vld [vmem:[%s1 + $0x20] sm:$0xff]
  %v98 = vld [vmem:[%s1 + $0x28] sm:$0xff]
  %v99 = vld [vmem:[%s1 + $0x30] sm:$0x1]
  %v100 = vld [vmem:[%s0] sm:$0xff]
  %v101 = vld [vmem:[%s0 + $0x8] sm:$0xff]
  %v102 = vld [vmem:[%s0 + $0x10] sm:$0xff]
  %v103 = vld [vmem:[%s0 + $0x18] sm:$0xff]
  %v104 = vld [vmem:[%s0 + $0x20] sm:$0xff]
  %v105 = vld [vmem:[%s0 + $0x28] sm:$0xff]
  %v106 = vld [vmem:[%s0 + $0x30] sm:$0xff]
  %v107 = vld [vmem:[%s0 + $0x38] sm:$0xff]
  %v108 = vld [vmem:[%s0 + $0x40] sm:$0xff]
  %v109 = vld [vmem:[%s0 + $0x48] sm:$0xff]
  %v110 = vld [vmem:[%s0 + $0x50] sm:$0xff]
  %v111 = vld [vmem:[%s0 + $0x58] sm:$0xff]
  %v112 = vld [vmem:[%s0 + $0x60] sm:$0xff]
  %v113 = vld [vmem:[%s0 + $0x68] sm:$0xff]
  %v114 = vld [vmem:[%s0 + $0x70] sm:$0xff]
  %v115 = vld [vmem:[%s0 + $0x78] sm:$0xff]
  %v116 = vperm.slane %v99, 0
  %v118 = vsel %vm73, %v100, 0
  %v121 = vsel %vm73, %v101, 0
  %v124 = vsel %vm73, %v102, 0
  %v127 = vsel %vm73, %v103, 0
  %v130 = vsel %vm73, %v104, 0
  %v133 = vsel %vm73, %v105, 0
  %v136 = vsel %vm73, %v106, 0
  %v139 = vsel %vm73, %v107, 0
  %v142 = vsel %vm73, %v108, 0
  %v145 = vsel %vm73, %v109, 0
  %v148 = vsel %vm73, %v110, 0
  %v151 = vsel %vm73, %v111, 0
  %v154 = vsel %vm73, %v112, 0
  %v157 = vsel %vm73, %v113, 0
  %v160 = vsel %vm73, %v114, 0
  %v163 = vsel %vm73, %v115, 0
  %165 = vmatpush.msra.mxu0 0.0
  %166 = vmatpush.msra.mxu0 0.0
  %167 = vmatpush.msra.mxu0 0.0
  %168 = vmatpush.msra.mxu0 0.0
  %169 = vmatpush.msra.mxu0 0.0
  %170 = vmatpush.msra.mxu0 0.0
  %171 = vmatpush.msra.mxu0 0.0
  %172 = vmatpush.msra.mxu0 0.0
  %173 = vmatpush.msra.mxu0 0.0
  %174 = vmatpush.msra.mxu0 0.0
  %175 = vmatpush.msra.mxu0 0.0
  %176 = vmatpush.msra.mxu0 0.0
  %177 = vmatpush.msra.mxu0 0.0
  %178 = vmatpush.msra.mxu0 0.0
  %179 = vmatpush.msra.mxu0 %v94
  %180 = vmatpush.msra.mxu0 %v93
  %181 = vmatmul.f32.gmra.mxu0 %v118
  %v182 = vpop.f32.mrf.mxu0
  %v183 = vadd.f32 %v116, %v182
  %184 = vmatmul.f32.gmra.mxu0 %v121
  %v185 = vpop.f32.mrf.mxu0
  %v186 = vadd.f32 %v116, %v185
  %187 = vmatmul.f32.gmra.mxu0 %v124
  %v188 = vpop.f32.mrf.mxu0
  %v189 = vadd.f32 %v116, %v188
  %190 = vmatmul.f32.gmra.mxu0 %v127
  %v191 = vpop.f32.mrf.mxu0
  %v192 = vadd.f32 %v116, %v191
  %193 = vmatmul.f32.gmra.mxu0 %v130
  %v194 = vpop.f32.mrf.mxu0
  %v195 = vadd.f32 %v116, %v194
  %196 = vmatmul.f32.gmra.mxu0 %v133
  %v197 = vpop.f32.mrf.mxu0
  %v198 = vadd.f32 %v116, %v197
  %199 = vmatmul.f32.gmra.mxu0 %v136
  %v200 = vpop.f32.mrf.mxu0
  %v201 = vadd.f32 %v116, %v200
  %202 = vmatmul.f32.gmra.mxu0 %v139
  %v203 = vpop.f32.mrf.mxu0
  %v204 = vadd.f32 %v116, %v203
  %205 = vmatmul.f32.gmra.mxu0 %v142
  %v206 = vpop.f32.mrf.mxu0
  %v207 = vadd.f32 %v116, %v206
  %208 = vmatmul.f32.gmra.mxu0 %v145
  %v209 = vpop.f32.mrf.mxu0
  %v210 = vadd.f32 %v116, %v209
  %211 = vmatmul.f32.gmra.mxu0 %v148
  %v212 = vpop.f32.mrf.mxu0
  %v213 = vadd.f32 %v116, %v212
  %214 = vmatmul.f32.gmra.mxu0 %v151
  %v215 = vpop.f32.mrf.mxu0
  %v216 = vadd.f32 %v116, %v215
  %217 = vmatmul.f32.gmra.mxu0 %v154
  %v218 = vpop.f32.mrf.mxu0
  %v219 = vadd.f32 %v116, %v218
  %220 = vmatmul.f32.gmra.mxu0 %v157
  %v221 = vpop.f32.mrf.mxu0
  %v222 = vadd.f32 %v116, %v221
  %223 = vmatmul.f32.gmra.mxu0 %v160
  %v224 = vpop.f32.mrf.mxu0
  %v225 = vadd.f32 %v116, %v224
  %226 = vmatmul.f32.gmra.mxu0 %v163
  %v227 = vpop.f32.mrf.mxu0
  %v228 = vadd.f32 %v116, %v227
  %229 = vdwg.mxu0
  %vm230 = vcmask 261120
  %v232 = vsel %vm230, 0.0, 0
  %234 = vmatpush.msra.mxu0 0.0
  %235 = vmatpush.msra.mxu0 0.0
  %236 = vmatpush.msra.mxu0 0.0
  %237 = vmatpush.msra.mxu0 0.0
  %238 = vmatpush.msra.mxu0 0.0
  %239 = vmatpush.msra.mxu0 0.0
  %240 = vmatpush.msra.mxu0 0.0
  %241 = vmatpush.msra.mxu0 0.0
  %242 = vmatpush.msra.mxu0 0.0
  %243 = vmatpush.msra.mxu0 0.0
  %244 = vmatpush.msra.mxu0 0.0
  %245 = vmatpush.msra.mxu0 0.0
  %246 = vmatpush.msra.mxu0 %v98
  %247 = vmatpush.msra.mxu0 %v97
  %248 = vmatpush.msra.mxu0 %v96
  %249 = vmatpush.msra.mxu0 %v95
  %250 = vmatmul.f32.gmra.mxu0 %v232
  %v251 = vpop.f32.mrf.mxu0
  %v252 = vadd.f32 0.0, %v251
  %253 = vmatmul.f32.gmra.mxu0 %v232
  %v254 = vpop.f32.mrf.mxu0
  %v255 = vadd.f32 0.0, %v254
  %256 = vdwg.mxu0
  %v257 = vadd.f32 %v183, %v252
  %v258 = vadd.f32 %v186, %v255
  %v259 = vxor.u32 %v257, 2147483648
  %v260 = vxor.u32 %v258, 2147483648
  %v261 = vmul.f32 %v259, 1.442695
  %v262 = vpow.pop %v261
  %v263 = vmul.f32 %v260, 1.442695
  %v264 = vpow.pop %v263
  %v265 = vadd.f32 %v262, 1.0
  %v266 = vadd.f32 %v264, 1.0
  %v267 = vrcp.pop %v265
  %v268 = vmul.f32 %v265, %v267
  %v269 = vsub.f32 1.0, %v268
  %v270 = vmul.f32 %v267, %v269
  %v271 = vadd.f32 %v267, %v270
  %vm272 = vweird.f32 %v265
  %vm273 = vweird.f32 %v267
  %vm274 = vmor %vm272, %vm273
  %v275 = vsel %vm274, %v267, %v271
  %v276 = vand.u32 2147483647, %v265
  %vm277 = vcmp.eq.f32.partialorder %v276, 8.507059e+37
  %v278 = vand.u32 %v265, 2147483648
  %v279 = vor.u32 1.1754944e-38, %v278
  %v280 = vsel %vm277, %v279, %v275
  %v281 = vmul.f32 1.0, %v280
  %v282 = vrcp.pop %v266
  %v283 = vmul.f32 %v266, %v282
  %v284 = vsub.f32 1.0, %v283
  %v285 = vmul.f32 %v282, %v284
  %v286 = vadd.f32 %v282, %v285
  %vm287 = vweird.f32 %v266
  %vm288 = vweird.f32 %v282
  %vm289 = vmor %vm287, %vm288
  %v290 = vsel %vm289, %v282, %v286
  %v291 = vand.u32 2147483647, %v266
  %vm292 = vcmp.eq.f32.partialorder %v291, 8.507059e+37
  %v293 = vand.u32 %v266, 2147483648
  %v294 = vor.u32 1.1754944e-38, %v293
  %v295 = vsel %vm292, %v294, %v290
  %v296 = vmul.f32 1.0, %v295
  %v297 = vtanh.pop %v257
  %v298 = vtanh.pop %v258
  %v299 = vmul.f32 %v281, 0.0
  %v300 = vmul.f32 %v296, 0.0
  %303 = vrot.lane.b32.xlu0 %v297, 32
  %v304 = vpop.permute.xlu0 %303
  %305 = vrot.lane.b32.xlu0 %v298, 32
  %v306 = vpop.permute.xlu0 %305
  %v309 = vmul.f32 %v281, %v304
  %v310 = vmul.f32 %v296, %v306
  %313 = vrot.lane.b32.xlu0 %v309, 32
  %v314 = vpop.permute.xlu0 %313
  %315 = vrot.lane.b32.xlu0 %v310, 32
  %v316 = vpop.permute.xlu0 %315
  %v319 = vadd.f32 %v299, %v314
  %v320 = vadd.f32 %v300, %v316
  %v321 = vtanh.pop %v319
  %v322 = vtanh.pop %v320
  %325 = vrot.lane.b32.xlu0 %v321, 32
  %v326 = vpop.permute.xlu0 %325
  %327 = vrot.lane.b32.xlu0 %v322, 32
  %v328 = vpop.permute.xlu0 %327
  %v331 = vmul.f32 %v281, %v326
  %v332 = vmul.f32 %v296, %v328
  %v333 = vld [vmem:[%s2] sm:$0xff]
  %v334 = vld [vmem:[%s2 + $0x8] sm:$0xff]
  %v335 = vld [vmem:[%s2 + $0x10] sm:$0xff]
  %v336 = vld [vmem:[%s2 + $0x18] sm:$0xff]
  %339 = vrot.lane.b32.xlu0 %v331, 64
  %v340 = vpop.permute.xlu0 %339
  %341 = vrot.lane.b32.xlu0 %v332, 64
  %v342 = vpop.permute.xlu0 %341
  %v343 = vsel %vm230, %v340, 0
  %v345 = vsel %vm230, %v342, 0
  %347 = vmatpush.msra.mxu0 0.0
  %348 = vmatpush.msra.mxu0 0.0
  %349 = vmatpush.msra.mxu0 0.0
  %350 = vmatpush.msra.mxu0 0.0
  %351 = vmatpush.msra.mxu0 0.0
  %352 = vmatpush.msra.mxu0 0.0
  %353 = vmatpush.msra.mxu0 0.0
  %354 = vmatpush.msra.mxu0 0.0
  %355 = vmatpush.msra.mxu0 0.0
  %356 = vmatpush.msra.mxu0 0.0
  %357 = vmatpush.msra.mxu0 0.0
  %358 = vmatpush.msra.mxu0 0.0
  %359 = vmatpush.msra.mxu0 %v98
  %360 = vmatpush.msra.mxu0 %v97
  %361 = vmatpush.msra.mxu0 %v96
  %362 = vmatpush.msra.mxu0 %v95
  %363 = vmatmul.f32.gmra.mxu0 %v343
  %v364 = vpop.f32.mrf.mxu0
  %v365 = vadd.f32 0.0, %v364
  %366 = vmatmul.f32.gmra.mxu0 %v345
  %v367 = vpop.f32.mrf.mxu0
  %v368 = vadd.f32 0.0, %v367
  %369 = vdwg.mxu0
  %v370 = vadd.f32 %v189, %v365
  %v371 = vadd.f32 %v192, %v368
  %v372 = vxor.u32 %v370, 2147483648
  %v373 = vxor.u32 %v371, 2147483648
  %v374 = vmul.f32 %v372, 1.442695
  %v375 = vpow.pop %v374
  %v376 = vmul.f32 %v373, 1.442695
  %v377 = vpow.pop %v376
  %v378 = vadd.f32 %v375, 1.0
  %v379 = vadd.f32 %v377, 1.0
  %v380 = vrcp.pop %v378
  %v381 = vmul.f32 %v378, %v380
  %v382 = vsub.f32 1.0, %v381
  %v383 = vmul.f32 %v380, %v382
  %v384 = vadd.f32 %v380, %v383
  %vm385 = vweird.f32 %v378
  %vm386 = vweird.f32 %v380
  %vm387 = vmor %vm385, %vm386
  %v388 = vsel %vm387, %v380, %v384
  %v389 = vand.u32 2147483647, %v378
  %vm390 = vcmp.eq.f32.partialorder %v389, 8.507059e+37
  %v391 = vand.u32 %v378, 2147483648
  %v392 = vor.u32 1.1754944e-38, %v391
  %v393 = vsel %vm390, %v392, %v388
  %v394 = vmul.f32 1.0, %v393
  %v395 = vrcp.pop %v379
  %v396 = vmul.f32 %v379, %v395
  %v397 = vsub.f32 1.0, %v396
  %v398 = vmul.f32 %v395, %v397
  %v399 = vadd.f32 %v395, %v398
  %vm400 = vweird.f32 %v379
  %vm401 = vweird.f32 %v395
  %vm402 = vmor %vm400, %vm401
  %v403 = vsel %vm402, %v395, %v399
  %v404 = vand.u32 2147483647, %v379
  %vm405 = vcmp.eq.f32.partialorder %v404, 8.507059e+37
  %v406 = vand.u32 %v379, 2147483648
  %v407 = vor.u32 1.1754944e-38, %v406
  %v408 = vsel %vm405, %v407, %v403
  %v409 = vmul.f32 1.0, %v408
  %v410 = vtanh.pop %v370
  %v411 = vtanh.pop %v371
  %v412 = vmul.f32 %v394, %v319
  %v413 = vmul.f32 %v409, %v320
  %416 = vrot.lane.b32.xlu0 %v410, 32
  %v417 = vpop.permute.xlu0 %416
  %418 = vrot.lane.b32.xlu0 %v411, 32
  %v419 = vpop.permute.xlu0 %418
  %v422 = vmul.f32 %v394, %v417
  %v423 = vmul.f32 %v409, %v419
  %426 = vrot.lane.b32.xlu0 %v422, 32
  %v427 = vpop.permute.xlu0 %426
  %428 = vrot.lane.b32.xlu0 %v423, 32
  %v429 = vpop.permute.xlu0 %428
  %v432 = vadd.f32 %v412, %v427
  %v433 = vadd.f32 %v413, %v429
  %v434 = vtanh.pop %v432
  %v435 = vtanh.pop %v433
  %438 = vrot.lane.b32.xlu0 %v434, 32
  %v439 = vpop.permute.xlu0 %438
  %440 = vrot.lane.b32.xlu0 %v435, 32
  %v441 = vpop.permute.xlu0 %440
  %v444 = vmul.f32 %v394, %v439
  %v445 = vmul.f32 %v409, %v441
  %v446 = vld [vmem:[%s2 + $0x20] sm:$0xff]
  %v447 = vld [vmem:[%s2 + $0x28] sm:$0xff]
  %v448 = vld [vmem:[%s2 + $0x30] sm:$0xff]
  %v449 = vld [vmem:[%s2 + $0x38] sm:$0xff]
  %452 = vrot.lane.b32.xlu0 %v444, 64
  %v453 = vpop.permute.xlu0 %452
  %454 = vrot.lane.b32.xlu0 %v445, 64
  %v455 = vpop.permute.xlu0 %454
  %v456 = vsel %vm230, %v453, 0
  %v458 = vsel %vm230, %v455, 0
  %460 = vmatpush.msra.mxu0 0.0
  %461 = vmatpush.msra.mxu0 0.0
  %462 = vmatpush.msra.mxu0 0.0
  %463 = vmatpush.msra.mxu0 0.0
  %464 = vmatpush.msra.mxu0 0.0
  %465 = vmatpush.msra.mxu0 0.0
  %466 = vmatpush.msra.mxu0 0.0
  %467 = vmatpush.msra.mxu0 0.0
  %468 = vmatpush.msra.mxu0 0.0
  %469 = vmatpush.msra.mxu0 0.0
  %470 = vmatpush.msra.mxu0 0.0
  %471 = vmatpush.msra.mxu0 0.0
  %472 = vmatpush.msra.mxu0 %v449
  %473 = vmatpush.msra.mxu0 %v448
  %474 = vmatpush.msra.mxu0 %v447
  %475 = vmatpush.msra.mxu0 %v446
  %476 = vmatmul.f32.gmra.mxu0 %v456
  %v477 = vpop.f32.mrf.mxu0
  %v478 = vadd.f32 0.0, %v477
  %479 = vmatmul.f32.gmra.mxu0 %v458
  %v480 = vpop.f32.mrf.mxu0
  %v481 = vadd.f32 0.0, %v480
  %482 = vdwg.mxu0
  %483 = vmatpush.msra.mxu0 0.0
  %484 = vmatpush.msra.mxu0 0.0
  %485 = vmatpush.msra.mxu0 0.0
  %486 = vmatpush.msra.mxu0 0.0
  %487 = vmatpush.msra.mxu0 0.0
  %488 = vmatpush.msra.mxu0 0.0
  %489 = vmatpush.msra.mxu0 0.0
  %490 = vmatpush.msra.mxu0 0.0
  %491 = vmatpush.msra.mxu0 0.0
  %492 = vmatpush.msra.mxu0 0.0
  %493 = vmatpush.msra.mxu0 0.0
  %494 = vmatpush.msra.mxu0 0.0
  %495 = vmatpush.msra.mxu0 %v336
  %496 = vmatpush.msra.mxu0 %v335
  %497 = vmatpush.msra.mxu0 %v334
  %498 = vmatpush.msra.mxu0 %v333
  %499 = vmatmul.f32.gmra.mxu0 %v343
  %v500 = vpop.f32.mrf.mxu0
  %v501 = vadd.f32 %v478, %v500
  %502 = vmatmul.f32.gmra.mxu0 %v345
  %v503 = vpop.f32.mrf.mxu0
  %v504 = vadd.f32 %v481, %v503
  %505 = vdwg.mxu0
  %506 = vmatpush.msra.mxu0 0.0
  %507 = vmatpush.msra.mxu0 0.0
  %508 = vmatpush.msra.mxu0 0.0
  %509 = vmatpush.msra.mxu0 0.0
  %510 = vmatpush.msra.mxu0 0.0
  %511 = vmatpush.msra.mxu0 0.0
  %512 = vmatpush.msra.mxu0 0.0
  %513 = vmatpush.msra.mxu0 0.0
  %514 = vmatpush.msra.mxu0 0.0
  %515 = vmatpush.msra.mxu0 0.0
  %516 = vmatpush.msra.mxu0 0.0
  %517 = vmatpush.msra.mxu0 0.0
  %518 = vmatpush.msra.mxu0 %v98
  %519 = vmatpush.msra.mxu0 %v97
  %520 = vmatpush.msra.mxu0 %v96
  %521 = vmatpush.msra.mxu0 %v95
  %522 = vmatmul.f32.gmra.mxu0 %v456
  %v523 = vpop.f32.mrf.mxu0
  %v524 = vadd.f32 0.0, %v523
  %525 = vmatmul.f32.gmra.mxu0 %v458
  %v526 = vpop.f32.mrf.mxu0
  %v527 = vadd.f32 0.0, %v526
  %528 = vdwg.mxu0
  %v529 = vadd.f32 %v195, %v524
  %v530 = vadd.f32 %v198, %v527
  %v531 = vxor.u32 %v529, 2147483648
  %v532 = vxor.u32 %v530, 2147483648
  %v533 = vmul.f32 %v531, 1.442695
  %v534 = vpow.pop %v533
  %v535 = vmul.f32 %v532, 1.442695
  %v536 = vpow.pop %v535
  %v537 = vadd.f32 %v534, 1.0
  %v538 = vadd.f32 %v536, 1.0
  %v539 = vrcp.pop %v537
  %v540 = vmul.f32 %v537, %v539
  %v541 = vsub.f32 1.0, %v540
  %v542 = vmul.f32 %v539, %v541
  %v543 = vadd.f32 %v539, %v542
  %vm544 = vweird.f32 %v537
  %vm545 = vweird.f32 %v539
  %vm546 = vmor %vm544, %vm545
  %v547 = vsel %vm546, %v539, %v543
  %v548 = vand.u32 2147483647, %v537
  %vm549 = vcmp.eq.f32.partialorder %v548, 8.507059e+37
  %v550 = vand.u32 %v537, 2147483648
  %v551 = vor.u32 1.1754944e-38, %v550
  %v552 = vsel %vm549, %v551, %v547
  %v553 = vmul.f32 1.0, %v552
  %v554 = vrcp.pop %v538
  %v555 = vmul.f32 %v538, %v554
  %v556 = vsub.f32 1.0, %v555
  %v557 = vmul.f32 %v554, %v556
  %v558 = vadd.f32 %v554, %v557
  %vm559 = vweird.f32 %v538
  %vm560 = vweird.f32 %v554
  %vm561 = vmor %vm559, %vm560
  %v562 = vsel %vm561, %v554, %v558
  %v563 = vand.u32 2147483647, %v538
  %vm564 = vcmp.eq.f32.partialorder %v563, 8.507059e+37
  %v565 = vand.u32 %v538, 2147483648
  %v566 = vor.u32 1.1754944e-38, %v565
  %v567 = vsel %vm564, %v566, %v562
  %v568 = vmul.f32 1.0, %v567
  %v569 = vtanh.pop %v529
  %v570 = vtanh.pop %v530
  %v571 = vmul.f32 %v553, %v432
  %v572 = vmul.f32 %v568, %v433
  %575 = vrot.lane.b32.xlu0 %v569, 32
  %v576 = vpop.permute.xlu0 %575
  %577 = vrot.lane.b32.xlu0 %v570, 32
  %v578 = vpop.permute.xlu0 %577
  %v581 = vmul.f32 %v553, %v576
  %v582 = vmul.f32 %v568, %v578
  %585 = vrot.lane.b32.xlu0 %v581, 32
  %v586 = vpop.permute.xlu0 %585
  %587 = vrot.lane.b32.xlu0 %v582, 32
  %v588 = vpop.permute.xlu0 %587
  %v591 = vadd.f32 %v571, %v586
  %v592 = vadd.f32 %v572, %v588
  %v593 = vtanh.pop %v591
  %v594 = vtanh.pop %v592
  %597 = vrot.lane.b32.xlu0 %v593, 32
  %v598 = vpop.permute.xlu0 %597
  %599 = vrot.lane.b32.xlu0 %v594, 32
  %v600 = vpop.permute.xlu0 %599
  %v603 = vmul.f32 %v553, %v598
  %v604 = vmul.f32 %v568, %v600
  %v605 = vld [vmem:[%s2 + $0x40] sm:$0xff]
  %v606 = vld [vmem:[%s2 + $0x48] sm:$0xff]
  %v607 = vld [vmem:[%s2 + $0x50] sm:$0xff]
  %v608 = vld [vmem:[%s2 + $0x58] sm:$0xff]
  %611 = vrot.lane.b32.xlu0 %v603, 64
  %v612 = vpop.permute.xlu0 %611
  %613 = vrot.lane.b32.xlu0 %v604, 64
  %v614 = vpop.permute.xlu0 %613
  %v615 = vsel %vm230, %v612, 0
  %v617 = vsel %vm230, %v614, 0
  %619 = vmatpush.msra.mxu0 0.0
  %620 = vmatpush.msra.mxu0 0.0
  %621 = vmatpush.msra.mxu0 0.0
  %622 = vmatpush.msra.mxu0 0.0
  %623 = vmatpush.msra.mxu0 0.0
  %624 = vmatpush.msra.mxu0 0.0
  %625 = vmatpush.msra.mxu0 0.0
  %626 = vmatpush.msra.mxu0 0.0
  %627 = vmatpush.msra.mxu0 0.0
  %628 = vmatpush.msra.mxu0 0.0
  %629 = vmatpush.msra.mxu0 0.0
  %630 = vmatpush.msra.mxu0 0.0
  %631 = vmatpush.msra.mxu0 %v608
  %632 = vmatpush.msra.mxu0 %v607
  %633 = vmatpush.msra.mxu0 %v606
  %634 = vmatpush.msra.mxu0 %v605
  %635 = vmatmul.f32.gmra.mxu0 %v615
  %v636 = vpop.f32.mrf.mxu0
  %v637 = vadd.f32 0.0, %v636
  %638 = vmatmul.f32.gmra.mxu0 %v617
  %v639 = vpop.f32.mrf.mxu0
  %v640 = vadd.f32 0.0, %v639
  %641 = vdwg.mxu0
  %v642 = vadd.f32 %v501, %v637
  %v643 = vadd.f32 %v504, %v640
  %644 = vmatpush.msra.mxu0 0.0
  %645 = vmatpush.msra.mxu0 0.0
  %646 = vmatpush.msra.mxu0 0.0
  %647 = vmatpush.msra.mxu0 0.0
  %648 = vmatpush.msra.mxu0 0.0
  %649 = vmatpush.msra.mxu0 0.0
  %650 = vmatpush.msra.mxu0 0.0
  %651 = vmatpush.msra.mxu0 0.0
  %652 = vmatpush.msra.mxu0 0.0
  %653 = vmatpush.msra.mxu0 0.0
  %654 = vmatpush.msra.mxu0 0.0
  %655 = vmatpush.msra.mxu0 0.0
  %656 = vmatpush.msra.mxu0 %v98
  %657 = vmatpush.msra.mxu0 %v97
  %658 = vmatpush.msra.mxu0 %v96
  %659 = vmatpush.msra.mxu0 %v95
  %660 = vmatmul.f32.gmra.mxu0 %v615
  %v661 = vpop.f32.mrf.mxu0
  %v662 = vadd.f32 0.0, %v661
  %663 = vmatmul.f32.gmra.mxu0 %v617
  %v664 = vpop.f32.mrf.mxu0
  %v665 = vadd.f32 0.0, %v664
  %666 = vdwg.mxu0
  %v667 = vadd.f32 %v201, %v662
  %v668 = vadd.f32 %v204, %v665
  %v669 = vxor.u32 %v667, 2147483648
  %v670 = vxor.u32 %v668, 2147483648
  %v671 = vmul.f32 %v669, 1.442695
  %v672 = vpow.pop %v671
  %v673 = vmul.f32 %v670, 1.442695
  %v674 = vpow.pop %v673
  %v675 = vadd.f32 %v672, 1.0
  %v676 = vadd.f32 %v674, 1.0
  %v677 = vrcp.pop %v675
  %v678 = vmul.f32 %v675, %v677
  %v679 = vsub.f32 1.0, %v678
  %v680 = vmul.f32 %v677, %v679
  %v681 = vadd.f32 %v677, %v680
  %vm682 = vweird.f32 %v675
  %vm683 = vweird.f32 %v677
  %vm684 = vmor %vm682, %vm683
  %v685 = vsel %vm684, %v677, %v681
  %v686 = vand.u32 2147483647, %v675
  %vm687 = vcmp.eq.f32.partialorder %v686, 8.507059e+37
  %v688 = vand.u32 %v675, 2147483648
  %v689 = vor.u32 1.1754944e-38, %v688
  %v690 = vsel %vm687, %v689, %v685
  %v691 = vmul.f32 1.0, %v690
  %v692 = vrcp.pop %v676
  %v693 = vmul.f32 %v676, %v692
  %v694 = vsub.f32 1.0, %v693
  %v695 = vmul.f32 %v692, %v694
  %v696 = vadd.f32 %v692, %v695
  %vm697 = vweird.f32 %v676
  %vm698 = vweird.f32 %v692
  %vm699 = vmor %vm697, %vm698
  %v700 = vsel %vm699, %v692, %v696
  %v701 = vand.u32 2147483647, %v676
  %vm702 = vcmp.eq.f32.partialorder %v701, 8.507059e+37
  %v703 = vand.u32 %v676, 2147483648
  %v704 = vor.u32 1.1754944e-38, %v703
  %v705 = vsel %vm702, %v704, %v700
  %v706 = vmul.f32 1.0, %v705
  %v707 = vtanh.pop %v667
  %v708 = vtanh.pop %v668
  %v709 = vmul.f32 %v691, %v591
  %v710 = vmul.f32 %v706, %v592
  %713 = vrot.lane.b32.xlu0 %v707, 32
  %v714 = vpop.permute.xlu0 %713
  %715 = vrot.lane.b32.xlu0 %v708, 32
  %v716 = vpop.permute.xlu0 %715
  %v719 = vmul.f32 %v691, %v714
  %v720 = vmul.f32 %v706, %v716
  %723 = vrot.lane.b32.xlu0 %v719, 32
  %v724 = vpop.permute.xlu0 %723
  %725 = vrot.lane.b32.xlu0 %v720, 32
  %v726 = vpop.permute.xlu0 %725
  %v729 = vadd.f32 %v709, %v724
  %v730 = vadd.f32 %v710, %v726
  %v731 = vtanh.pop %v729
  %v732 = vtanh.pop %v730
  %735 = vrot.lane.b32.xlu0 %v731, 32
  %v736 = vpop.permute.xlu0 %735
  %737 = vrot.lane.b32.xlu0 %v732, 32
  %v738 = vpop.permute.xlu0 %737
  %v741 = vmul.f32 %v691, %v736
  %v742 = vmul.f32 %v706, %v738
  %v743 = vld [vmem:[%s2 + $0x60] sm:$0xff]
  %v744 = vld [vmem:[%s2 + $0x68] sm:$0xff]
  %v745 = vld [vmem:[%s2 + $0x70] sm:$0xff]
  %v746 = vld [vmem:[%s2 + $0x78] sm:$0xff]
  %749 = vrot.lane.b32.xlu0 %v741, 64
  %v750 = vpop.permute.xlu0 %749
  %751 = vrot.lane.b32.xlu0 %v742, 64
  %v752 = vpop.permute.xlu0 %751
  %v753 = vsel %vm230, %v750, 0
  %v755 = vsel %vm230, %v752, 0
  %757 = vmatpush.msra.mxu0 0.0
  %758 = vmatpush.msra.mxu0 0.0
  %759 = vmatpush.msra.mxu0 0.0
  %760 = vmatpush.msra.mxu0 0.0
  %761 = vmatpush.msra.mxu0 0.0
  %762 = vmatpush.msra.mxu0 0.0
  %763 = vmatpush.msra.mxu0 0.0
  %764 = vmatpush.msra.mxu0 0.0
  %765 = vmatpush.msra.mxu0 0.0
  %766 = vmatpush.msra.mxu0 0.0
  %767 = vmatpush.msra.mxu0 0.0
  %768 = vmatpush.msra.mxu0 0.0
  %769 = vmatpush.msra.mxu0 %v746
  %770 = vmatpush.msra.mxu0 %v745
  %771 = vmatpush.msra.mxu0 %v744
  %772 = vmatpush.msra.mxu0 %v743
  %773 = vmatmul.f32.gmra.mxu0 %v753
  %v774 = vpop.f32.mrf.mxu0
  %v775 = vadd.f32 0.0, %v774
  %776 = vmatmul.f32.gmra.mxu0 %v755
  %v777 = vpop.f32.mrf.mxu0
  %v778 = vadd.f32 0.0, %v777
  %779 = vdwg.mxu0
  %v780 = vadd.f32 %v642, %v775
  %v781 = vadd.f32 %v643, %v778
  %782 = vmatpush.msra.mxu0 0.0
  %783 = vmatpush.msra.mxu0 0.0
  %784 = vmatpush.msra.mxu0 0.0
  %785 = vmatpush.msra.mxu0 0.0
  %786 = vmatpush.msra.mxu0 0.0
  %787 = vmatpush.msra.mxu0 0.0
  %788 = vmatpush.msra.mxu0 0.0
  %789 = vmatpush.msra.mxu0 0.0
  %790 = vmatpush.msra.mxu0 0.0
  %791 = vmatpush.msra.mxu0 0.0
  %792 = vmatpush.msra.mxu0 0.0
  %793 = vmatpush.msra.mxu0 0.0
  %794 = vmatpush.msra.mxu0 %v98
  %795 = vmatpush.msra.mxu0 %v97
  %796 = vmatpush.msra.mxu0 %v96
  %797 = vmatpush.msra.mxu0 %v95
  %798 = vmatmul.f32.gmra.mxu0 %v753
  %v799 = vpop.f32.mrf.mxu0
  %v800 = vadd.f32 0.0, %v799
  %801 = vmatmul.f32.gmra.mxu0 %v755
  %v802 = vpop.f32.mrf.mxu0
  %v803 = vadd.f32 0.0, %v802
  %804 = vdwg.mxu0
  %v805 = vadd.f32 %v207, %v800
  %v806 = vadd.f32 %v210, %v803
  %v807 = vxor.u32 %v805, 2147483648
  %v808 = vxor.u32 %v806, 2147483648
  %v809 = vmul.f32 %v807, 1.442695
  %v810 = vpow.pop %v809
  %v811 = vmul.f32 %v808, 1.442695
  %v812 = vpow.pop %v811
  %v813 = vadd.f32 %v810, 1.0
  %v814 = vadd.f32 %v812, 1.0
  %v815 = vrcp.pop %v813
  %v816 = vmul.f32 %v813, %v815
  %v817 = vsub.f32 1.0, %v816
  %v818 = vmul.f32 %v815, %v817
  %v819 = vadd.f32 %v815, %v818
  %vm820 = vweird.f32 %v813
  %vm821 = vweird.f32 %v815
  %vm822 = vmor %vm820, %vm821
  %v823 = vsel %vm822, %v815, %v819
  %v824 = vand.u32 2147483647, %v813
  %vm825 = vcmp.eq.f32.partialorder %v824, 8.507059e+37
  %v826 = vand.u32 %v813, 2147483648
  %v827 = vor.u32 1.1754944e-38, %v826
  %v828 = vsel %vm825, %v827, %v823
  %v829 = vmul.f32 1.0, %v828
  %v830 = vrcp.pop %v814
  %v831 = vmul.f32 %v814, %v830
  %v832 = vsub.f32 1.0, %v831
  %v833 = vmul.f32 %v830, %v832
  %v834 = vadd.f32 %v830, %v833
  %vm835 = vweird.f32 %v814
  %vm836 = vweird.f32 %v830
  %vm837 = vmor %vm835, %vm836
  %v838 = vsel %vm837, %v830, %v834
  %v839 = vand.u32 2147483647, %v814
  %vm840 = vcmp.eq.f32.partialorder %v839, 8.507059e+37
  %v841 = vand.u32 %v814, 2147483648
  %v842 = vor.u32 1.1754944e-38, %v841
  %v843 = vsel %vm840, %v842, %v838
  %v844 = vmul.f32 1.0, %v843
  %v845 = vtanh.pop %v805
  %v846 = vtanh.pop %v806
  %v847 = vmul.f32 %v829, %v729
  %v848 = vmul.f32 %v844, %v730
  %851 = vrot.lane.b32.xlu0 %v845, 32
  %v852 = vpop.permute.xlu0 %851
  %853 = vrot.lane.b32.xlu0 %v846, 32
  %v854 = vpop.permute.xlu0 %853
  %v857 = vmul.f32 %v829, %v852
  %v858 = vmul.f32 %v844, %v854
  %861 = vrot.lane.b32.xlu0 %v857, 32
  %v862 = vpop.permute.xlu0 %861
  %863 = vrot.lane.b32.xlu0 %v858, 32
  %v864 = vpop.permute.xlu0 %863
  %v867 = vadd.f32 %v847, %v862
  %v868 = vadd.f32 %v848, %v864
  %v869 = vtanh.pop %v867
  %v870 = vtanh.pop %v868
  %873 = vrot.lane.b32.xlu0 %v869, 32
  %v874 = vpop.permute.xlu0 %873
  %875 = vrot.lane.b32.xlu0 %v870, 32
  %v876 = vpop.permute.xlu0 %875
  %v879 = vmul.f32 %v829, %v874
  %v880 = vmul.f32 %v844, %v876
  %v881 = vld [vmem:[%s2 + $0x80] sm:$0xff]
  %v882 = vld [vmem:[%s2 + $0x88] sm:$0xff]
  %v883 = vld [vmem:[%s2 + $0x90] sm:$0xff]
  %v884 = vld [vmem:[%s2 + $0x98] sm:$0xff]
  %887 = vrot.lane.b32.xlu0 %v879, 64
  %v888 = vpop.permute.xlu0 %887
  %889 = vrot.lane.b32.xlu0 %v880, 64
  %v890 = vpop.permute.xlu0 %889
  %v891 = vsel %vm230, %v888, 0
  %v893 = vsel %vm230, %v890, 0
  %895 = vmatpush.msra.mxu0 0.0
  %896 = vmatpush.msra.mxu0 0.0
  %897 = vmatpush.msra.mxu0 0.0
  %898 = vmatpush.msra.mxu0 0.0
  %899 = vmatpush.msra.mxu0 0.0
  %900 = vmatpush.msra.mxu0 0.0
  %901 = vmatpush.msra.mxu0 0.0
  %902 = vmatpush.msra.mxu0 0.0
  %903 = vmatpush.msra.mxu0 0.0
  %904 = vmatpush.msra.mxu0 0.0
  %905 = vmatpush.msra.mxu0 0.0
  %906 = vmatpush.msra.mxu0 0.0
  %907 = vmatpush.msra.mxu0 %v884
  %908 = vmatpush.msra.mxu0 %v883
  %909 = vmatpush.msra.mxu0 %v882
  %910 = vmatpush.msra.mxu0 %v881
  %911 = vmatmul.f32.gmra.mxu0 %v891
  %v912 = vpop.f32.mrf.mxu0
  %v913 = vadd.f32 0.0, %v912
  %914 = vmatmul.f32.gmra.mxu0 %v893
  %v915 = vpop.f32.mrf.mxu0
  %v916 = vadd.f32 0.0, %v915
  %917 = vdwg.mxu0
  %v918 = vadd.f32 %v780, %v913
  %v919 = vadd.f32 %v781, %v916
  %920 = vmatpush.msra.mxu0 0.0
  %921 = vmatpush.msra.mxu0 0.0
  %922 = vmatpush.msra.mxu0 0.0
  %923 = vmatpush.msra.mxu0 0.0
  %924 = vmatpush.msra.mxu0 0.0
  %925 = vmatpush.msra.mxu0 0.0
  %926 = vmatpush.msra.mxu0 0.0
  %927 = vmatpush.msra.mxu0 0.0
  %928 = vmatpush.msra.mxu0 0.0
  %929 = vmatpush.msra.mxu0 0.0
  %930 = vmatpush.msra.mxu0 0.0
  %931 = vmatpush.msra.mxu0 0.0
  %932 = vmatpush.msra.mxu0 %v98
  %933 = vmatpush.msra.mxu0 %v97
  %934 = vmatpush.msra.mxu0 %v96
  %935 = vmatpush.msra.mxu0 %v95
  %936 = vmatmul.f32.gmra.mxu0 %v891
  %v937 = vpop.f32.mrf.mxu0
  %v938 = vadd.f32 0.0, %v937
  %939 = vmatmul.f32.gmra.mxu0 %v893
  %v940 = vpop.f32.mrf.mxu0
  %v941 = vadd.f32 0.0, %v940
  %942 = vdwg.mxu0
  %v943 = vadd.f32 %v213, %v938
  %v944 = vadd.f32 %v216, %v941
  %v945 = vxor.u32 %v943, 2147483648
  %v946 = vxor.u32 %v944, 2147483648
  %v947 = vmul.f32 %v945, 1.442695
  %v948 = vpow.pop %v947
  %v949 = vmul.f32 %v946, 1.442695
  %v950 = vpow.pop %v949
  %v951 = vadd.f32 %v948, 1.0
  %v952 = vadd.f32 %v950, 1.0
  %v953 = vrcp.pop %v951
  %v954 = vmul.f32 %v951, %v953
  %v955 = vsub.f32 1.0, %v954
  %v956 = vmul.f32 %v953, %v955
  %v957 = vadd.f32 %v953, %v956
  %vm958 = vweird.f32 %v951
  %vm959 = vweird.f32 %v953
  %vm960 = vmor %vm958, %vm959
  %v961 = vsel %vm960, %v953, %v957
  %v962 = vand.u32 2147483647, %v951
  %vm963 = vcmp.eq.f32.partialorder %v962, 8.507059e+37
  %v964 = vand.u32 %v951, 2147483648
  %v965 = vor.u32 1.1754944e-38, %v964
  %v966 = vsel %vm963, %v965, %v961
  %v967 = vmul.f32 1.0, %v966
  %v968 = vrcp.pop %v952
  %v969 = vmul.f32 %v952, %v968
  %v970 = vsub.f32 1.0, %v969
  %v971 = vmul.f32 %v968, %v970
  %v972 = vadd.f32 %v968, %v971
  %vm973 = vweird.f32 %v952
  %vm974 = vweird.f32 %v968
  %vm975 = vmor %vm973, %vm974
  %v976 = vsel %vm975, %v968, %v972
  %v977 = vand.u32 2147483647, %v952
  %vm978 = vcmp.eq.f32.partialorder %v977, 8.507059e+37
  %v979 = vand.u32 %v952, 2147483648
  %v980 = vor.u32 1.1754944e-38, %v979
  %v981 = vsel %vm978, %v980, %v976
  %v982 = vmul.f32 1.0, %v981
  %v983 = vtanh.pop %v943
  %v984 = vtanh.pop %v944
  %v985 = vmul.f32 %v967, %v867
  %v986 = vmul.f32 %v982, %v868
  %989 = vrot.lane.b32.xlu0 %v983, 32
  %v990 = vpop.permute.xlu0 %989
  %991 = vrot.lane.b32.xlu0 %v984, 32
  %v992 = vpop.permute.xlu0 %991
  %v995 = vmul.f32 %v967, %v990
  %v996 = vmul.f32 %v982, %v992
  %999 = vrot.lane.b32.xlu0 %v995, 32
  %v1000 = vpop.permute.xlu0 %999
  %1001 = vrot.lane.b32.xlu0 %v996, 32
  %v1002 = vpop.permute.xlu0 %1001
  %v1005 = vadd.f32 %v985, %v1000
  %v1006 = vadd.f32 %v986, %v1002
  %v1007 = vtanh.pop %v1005
  %v1008 = vtanh.pop %v1006
  %1011 = vrot.lane.b32.xlu0 %v1007, 32
  %v1012 = vpop.permute.xlu0 %1011
  %1013 = vrot.lane.b32.xlu0 %v1008, 32
  %v1014 = vpop.permute.xlu0 %1013
  %v1017 = vmul.f32 %v967, %v1012
  %v1018 = vmul.f32 %v982, %v1014
  %v1019 = vld [vmem:[%s2 + $0xa0] sm:$0xff]
  %v1020 = vld [vmem:[%s2 + $0xa8] sm:$0xff]
  %v1021 = vld [vmem:[%s2 + $0xb0] sm:$0xff]
  %v1022 = vld [vmem:[%s2 + $0xb8] sm:$0xff]
  %1025 = vrot.lane.b32.xlu0 %v1017, 64
  %v1026 = vpop.permute.xlu0 %1025
  %1027 = vrot.lane.b32.xlu0 %v1018, 64
  %v1028 = vpop.permute.xlu0 %1027
  %v1029 = vsel %vm230, %v1026, 0
  %v1031 = vsel %vm230, %v1028, 0
  %1033 = vmatpush.msra.mxu0 0.0
  %1034 = vmatpush.msra.mxu0 0.0
  %1035 = vmatpush.msra.mxu0 0.0
  %1036 = vmatpush.msra.mxu0 0.0
  %1037 = vmatpush.msra.mxu0 0.0
  %1038 = vmatpush.msra.mxu0 0.0
  %1039 = vmatpush.msra.mxu0 0.0
  %1040 = vmatpush.msra.mxu0 0.0
  %1041 = vmatpush.msra.mxu0 0.0
  %1042 = vmatpush.msra.mxu0 0.0
  %1043 = vmatpush.msra.mxu0 0.0
  %1044 = vmatpush.msra.mxu0 0.0
  %1045 = vmatpush.msra.mxu0 %v1022
  %1046 = vmatpush.msra.mxu0 %v1021
  %1047 = vmatpush.msra.mxu0 %v1020
  %1048 = vmatpush.msra.mxu0 %v1019
  %1049 = vmatmul.f32.gmra.mxu0 %v1029
  %v1050 = vpop.f32.mrf.mxu0
  %v1051 = vadd.f32 0.0, %v1050
  %1052 = vmatmul.f32.gmra.mxu0 %v1031
  %v1053 = vpop.f32.mrf.mxu0
  %v1054 = vadd.f32 0.0, %v1053
  %1055 = vdwg.mxu0
  %v1056 = vadd.f32 %v918, %v1051
  %v1057 = vadd.f32 %v919, %v1054
  %1058 = vmatpush.msra.mxu0 0.0
  %1059 = vmatpush.msra.mxu0 0.0
  %1060 = vmatpush.msra.mxu0 0.0
  %1061 = vmatpush.msra.mxu0 0.0
  %1062 = vmatpush.msra.mxu0 0.0
  %1063 = vmatpush.msra.mxu0 0.0
  %1064 = vmatpush.msra.mxu0 0.0
  %1065 = vmatpush.msra.mxu0 0.0
  %1066 = vmatpush.msra.mxu0 0.0
  %1067 = vmatpush.msra.mxu0 0.0
  %1068 = vmatpush.msra.mxu0 0.0
  %1069 = vmatpush.msra.mxu0 0.0
  %1070 = vmatpush.msra.mxu0 %v98
  %1071 = vmatpush.msra.mxu0 %v97
  %1072 = vmatpush.msra.mxu0 %v96
  %1073 = vmatpush.msra.mxu0 %v95
  %1074 = vmatmul.f32.gmra.mxu0 %v1029
  %v1075 = vpop.f32.mrf.mxu0
  %v1076 = vadd.f32 0.0, %v1075
  %1077 = vmatmul.f32.gmra.mxu0 %v1031
  %v1078 = vpop.f32.mrf.mxu0
  %v1079 = vadd.f32 0.0, %v1078
  %1080 = vdwg.mxu0
  %v1081 = vadd.f32 %v219, %v1076
  %v1082 = vadd.f32 %v222, %v1079
  %v1083 = vxor.u32 %v1081, 2147483648
  %v1084 = vxor.u32 %v1082, 2147483648
  %v1085 = vmul.f32 %v1083, 1.442695
  %v1086 = vpow.pop %v1085
  %v1087 = vmul.f32 %v1084, 1.442695
  %v1088 = vpow.pop %v1087
  %v1089 = vadd.f32 %v1086, 1.0
  %v1090 = vadd.f32 %v1088, 1.0
  %v1091 = vrcp.pop %v1089
  %v1092 = vmul.f32 %v1089, %v1091
  %v1093 = vsub.f32 1.0, %v1092
  %v1094 = vmul.f32 %v1091, %v1093
  %v1095 = vadd.f32 %v1091, %v1094
  %vm1096 = vweird.f32 %v1089
  %vm1097 = vweird.f32 %v1091
  %vm1098 = vmor %vm1096, %vm1097
  %v1099 = vsel %vm1098, %v1091, %v1095
  %v1100 = vand.u32 2147483647, %v1089
  %vm1101 = vcmp.eq.f32.partialorder %v1100, 8.507059e+37
  %v1102 = vand.u32 %v1089, 2147483648
  %v1103 = vor.u32 1.1754944e-38, %v1102
  %v1104 = vsel %vm1101, %v1103, %v1099
  %v1105 = vmul.f32 1.0, %v1104
  %v1106 = vrcp.pop %v1090
  %v1107 = vmul.f32 %v1090, %v1106
  %v1108 = vsub.f32 1.0, %v1107
  %v1109 = vmul.f32 %v1106, %v1108
  %v1110 = vadd.f32 %v1106, %v1109
  %vm1111 = vweird.f32 %v1090
  %vm1112 = vweird.f32 %v1106
  %vm1113 = vmor %vm1111, %vm1112
  %v1114 = vsel %vm1113, %v1106, %v1110
  %v1115 = vand.u32 2147483647, %v1090
  %vm1116 = vcmp.eq.f32.partialorder %v1115, 8.507059e+37
  %v1117 = vand.u32 %v1090, 2147483648
  %v1118 = vor.u32 1.1754944e-38, %v1117
  %v1119 = vsel %vm1116, %v1118, %v1114
  %v1120 = vmul.f32 1.0, %v1119
  %v1121 = vtanh.pop %v1081
  %v1122 = vtanh.pop %v1082
  %v1123 = vmul.f32 %v1105, %v1005
  %v1124 = vmul.f32 %v1120, %v1006
  %1127 = vrot.lane.b32.xlu0 %v1121, 32
  %v1128 = vpop.permute.xlu0 %1127
  %1129 = vrot.lane.b32.xlu0 %v1122, 32
  %v1130 = vpop.permute.xlu0 %1129
  %v1133 = vmul.f32 %v1105, %v1128
  %v1134 = vmul.f32 %v1120, %v1130
  %1137 = vrot.lane.b32.xlu0 %v1133, 32
  %v1138 = vpop.permute.xlu0 %1137
  %1139 = vrot.lane.b32.xlu0 %v1134, 32
  %v1140 = vpop.permute.xlu0 %1139
  %v1143 = vadd.f32 %v1123, %v1138
  %v1144 = vadd.f32 %v1124, %v1140
  %v1145 = vtanh.pop %v1143
  %v1146 = vtanh.pop %v1144
  %1149 = vrot.lane.b32.xlu0 %v1145, 32
  %v1150 = vpop.permute.xlu0 %1149
  %1151 = vrot.lane.b32.xlu0 %v1146, 32
  %v1152 = vpop.permute.xlu0 %1151
  %v1155 = vmul.f32 %v1105, %v1150
  %v1156 = vmul.f32 %v1120, %v1152
  %v1157 = vld [vmem:[%s2 + $0xc0] sm:$0xff]
  %v1158 = vld [vmem:[%s2 + $0xc8] sm:$0xff]
  %v1159 = vld [vmem:[%s2 + $0xd0] sm:$0xff]
  %v1160 = vld [vmem:[%s2 + $0xd8] sm:$0xff]
  %1163 = vrot.lane.b32.xlu0 %v1155, 64
  %v1164 = vpop.permute.xlu0 %1163
  %1165 = vrot.lane.b32.xlu0 %v1156, 64
  %v1166 = vpop.permute.xlu0 %1165
  %v1167 = vsel %vm230, %v1164, 0
  %v1169 = vsel %vm230, %v1166, 0
  %1171 = vmatpush.msra.mxu0 0.0
  %1172 = vmatpush.msra.mxu0 0.0
  %1173 = vmatpush.msra.mxu0 0.0
  %1174 = vmatpush.msra.mxu0 0.0
  %1175 = vmatpush.msra.mxu0 0.0
  %1176 = vmatpush.msra.mxu0 0.0
  %1177 = vmatpush.msra.mxu0 0.0
  %1178 = vmatpush.msra.mxu0 0.0
  %1179 = vmatpush.msra.mxu0 0.0
  %1180 = vmatpush.msra.mxu0 0.0
  %1181 = vmatpush.msra.mxu0 0.0
  %1182 = vmatpush.msra.mxu0 0.0
  %1183 = vmatpush.msra.mxu0 %v1160
  %1184 = vmatpush.msra.mxu0 %v1159
  %1185 = vmatpush.msra.mxu0 %v1158
  %1186 = vmatpush.msra.mxu0 %v1157
  %1187 = vmatmul.f32.gmra.mxu0 %v1167
  %v1188 = vpop.f32.mrf.mxu0
  %v1189 = vadd.f32 0.0, %v1188
  %1190 = vmatmul.f32.gmra.mxu0 %v1169
  %v1191 = vpop.f32.mrf.mxu0
  %v1192 = vadd.f32 0.0, %v1191
  %1193 = vdwg.mxu0
  %v1194 = vadd.f32 %v1056, %v1189
  %v1195 = vadd.f32 %v1057, %v1192
  %1196 = vmatpush.msra.mxu0 0.0
  %1197 = vmatpush.msra.mxu0 0.0
  %1198 = vmatpush.msra.mxu0 0.0
  %1199 = vmatpush.msra.mxu0 0.0
  %1200 = vmatpush.msra.mxu0 0.0
  %1201 = vmatpush.msra.mxu0 0.0
  %1202 = vmatpush.msra.mxu0 0.0
  %1203 = vmatpush.msra.mxu0 0.0
  %1204 = vmatpush.msra.mxu0 0.0
  %1205 = vmatpush.msra.mxu0 0.0
  %1206 = vmatpush.msra.mxu0 0.0
  %1207 = vmatpush.msra.mxu0 0.0
  %1208 = vmatpush.msra.mxu0 %v98
  %1209 = vmatpush.msra.mxu0 %v97
  %1210 = vmatpush.msra.mxu0 %v96
  %1211 = vmatpush.msra.mxu0 %v95
  %1212 = vmatmul.f32.gmra.mxu0 %v1167
  %v1213 = vpop.f32.mrf.mxu0
  %v1214 = vadd.f32 0.0, %v1213
  %1215 = vmatmul.f32.gmra.mxu0 %v1169
  %v1216 = vpop.f32.mrf.mxu0
  %v1217 = vadd.f32 0.0, %v1216
  %1218 = vdwg.mxu0
  %v1219 = vadd.f32 %v225, %v1214
  %v1220 = vadd.f32 %v228, %v1217
  %v1221 = vxor.u32 %v1219, 2147483648
  %v1222 = vxor.u32 %v1220, 2147483648
  %v1223 = vmul.f32 %v1221, 1.442695
  %v1224 = vpow.pop %v1223
  %v1225 = vmul.f32 %v1222, 1.442695
  %v1226 = vpow.pop %v1225
  %v1227 = vadd.f32 %v1224, 1.0
  %v1228 = vadd.f32 %v1226, 1.0
  %v1229 = vrcp.pop %v1227
  %v1230 = vmul.f32 %v1227, %v1229
  %v1231 = vsub.f32 1.0, %v1230
  %v1232 = vmul.f32 %v1229, %v1231
  %v1233 = vadd.f32 %v1229, %v1232
  %vm1234 = vweird.f32 %v1227
  %vm1235 = vweird.f32 %v1229
  %vm1236 = vmor %vm1234, %vm1235
  %v1237 = vsel %vm1236, %v1229, %v1233
  %v1238 = vand.u32 2147483647, %v1227
  %vm1239 = vcmp.eq.f32.partialorder %v1238, 8.507059e+37
  %v1240 = vand.u32 %v1227, 2147483648
  %v1241 = vor.u32 1.1754944e-38, %v1240
  %v1242 = vsel %vm1239, %v1241, %v1237
  %v1243 = vmul.f32 1.0, %v1242
  %v1244 = vrcp.pop %v1228
  %v1245 = vmul.f32 %v1228, %v1244
  %v1246 = vsub.f32 1.0, %v1245
  %v1247 = vmul.f32 %v1244, %v1246
  %v1248 = vadd.f32 %v1244, %v1247
  %vm1249 = vweird.f32 %v1228
  %vm1250 = vweird.f32 %v1244
  %vm1251 = vmor %vm1249, %vm1250
  %v1252 = vsel %vm1251, %v1244, %v1248
  %v1253 = vand.u32 2147483647, %v1228
  %vm1254 = vcmp.eq.f32.partialorder %v1253, 8.507059e+37
  %v1255 = vand.u32 %v1228, 2147483648
  %v1256 = vor.u32 1.1754944e-38, %v1255
  %v1257 = vsel %vm1254, %v1256, %v1252
  %v1258 = vmul.f32 1.0, %v1257
  %v1259 = vtanh.pop %v1219
  %v1260 = vtanh.pop %v1220
  %v1261 = vmul.f32 %v1243, %v1143
  %v1262 = vmul.f32 %v1258, %v1144
  %1265 = vrot.lane.b32.xlu0 %v1259, 32
  %v1266 = vpop.permute.xlu0 %1265
  %1267 = vrot.lane.b32.xlu0 %v1260, 32
  %v1268 = vpop.permute.xlu0 %1267
  %v1271 = vmul.f32 %v1243, %v1266
  %v1272 = vmul.f32 %v1258, %v1268
  %1275 = vrot.lane.b32.xlu0 %v1271, 32
  %v1276 = vpop.permute.xlu0 %1275
  %1277 = vrot.lane.b32.xlu0 %v1272, 32
  %v1278 = vpop.permute.xlu0 %1277
  %v1281 = vadd.f32 %v1261, %v1276
  %v1282 = vadd.f32 %v1262, %v1278
  %v1283 = vtanh.pop %v1281
  %v1284 = vtanh.pop %v1282
  %1287 = vrot.lane.b32.xlu0 %v1283, 32
  %v1288 = vpop.permute.xlu0 %1287
  %1289 = vrot.lane.b32.xlu0 %v1284, 32
  %v1290 = vpop.permute.xlu0 %1289
  %v1293 = vmul.f32 %v1243, %v1288
  %v1294 = vmul.f32 %v1258, %v1290
  %v1295 = vld [vmem:[%s2 + $0xe0] sm:$0xff]
  %v1296 = vld [vmem:[%s2 + $0xe8] sm:$0xff]
  %v1297 = vld [vmem:[%s2 + $0xf0] sm:$0xff]
  %v1298 = vld [vmem:[%s2 + $0xf8] sm:$0xff]
  %1301 = vrot.lane.b32.xlu0 %v1293, 64
  %v1302 = vpop.permute.xlu0 %1301
  %1303 = vrot.lane.b32.xlu0 %v1294, 64
  %v1304 = vpop.permute.xlu0 %1303
  %v1305 = vsel %vm230, %v1302, 0
  %v1307 = vsel %vm230, %v1304, 0
  %1309 = vmatpush.msra.mxu0 0.0
  %1310 = vmatpush.msra.mxu0 0.0
  %1311 = vmatpush.msra.mxu0 0.0
  %1312 = vmatpush.msra.mxu0 0.0
  %1313 = vmatpush.msra.mxu0 0.0
  %1314 = vmatpush.msra.mxu0 0.0
  %1315 = vmatpush.msra.mxu0 0.0
  %1316 = vmatpush.msra.mxu0 0.0
  %1317 = vmatpush.msra.mxu0 0.0
  %1318 = vmatpush.msra.mxu0 0.0
  %1319 = vmatpush.msra.mxu0 0.0
  %1320 = vmatpush.msra.mxu0 0.0
  %1321 = vmatpush.msra.mxu0 %v1298
  %1322 = vmatpush.msra.mxu0 %v1297
  %1323 = vmatpush.msra.mxu0 %v1296
  %1324 = vmatpush.msra.mxu0 %v1295
  %1325 = vmatmul.f32.gmra.mxu0 %v1305
  %v1326 = vpop.f32.mrf.mxu0
  %v1327 = vadd.f32 0.0, %v1326
  %1328 = vmatmul.f32.gmra.mxu0 %v1307
  %v1329 = vpop.f32.mrf.mxu0
  %v1330 = vadd.f32 0.0, %v1329
  %1331 = vdwg.mxu0
  %v1332 = vadd.f32 %v1194, %v1327
  %v1333 = vadd.f32 %v1195, %v1330
  %v1334 = vld [vmem:[%s2 + $0x100] sm:$0x1]
  %1337 = vrot.lane.b32.xlu0 %v1332, 96
  %v1338 = vpop.permute.xlu0 %1337
  %1339 = vrot.lane.b32.xlu0 %v1333, 96
  %v1340 = vpop.permute.xlu0 %1339
  %v1344 = vsel %vm73, %v92, 0
  %1346 = vmatpush.msra.mxu0 0.0
  %1347 = vmatpush.msra.mxu0 0.0
  %1348 = vmatpush.msra.mxu0 0.0
  %1349 = vmatpush.msra.mxu0 0.0
  %1350 = vmatpush.msra.mxu0 0.0
  %1351 = vmatpush.msra.mxu0 0.0
  %1352 = vmatpush.msra.mxu0 0.0
  %1353 = vmatpush.msra.mxu0 0.0
  %1354 = vmatpush.msra.mxu0 0.0
  %1355 = vmatpush.msra.mxu0 0.0
  %1356 = vmatpush.msra.mxu0 0.0
  %1357 = vmatpush.msra.mxu0 0.0
  %1358 = vmatpush.msra.mxu0 0.0
  %1359 = vmatpush.msra.mxu0 0.0
  %1360 = vmatpush.msra.mxu0 %v1340
  %1361 = vmatpush.msra.mxu0 %v1338
  %1362 = vmatmul.f32.gmra.mxu0 %v1344
  %v1363 = vpop.f32.mrf.mxu0
  %v1364 = vadd.f32 0.0, %v1363
  %1365 = vdwg.mxu0
  %v1366 = vadd.f32 %v1332, %v1364
  %v1367 = vperm.slane %v1334, 0
  %v1368 = vadd.f32 %v1366, %v1367
  %v1369 = vmax.f32 %v1368, 0.0
  %v1370 = vld [vmem:[%s3] sm:$0xff]
  %v1371 = vld [vmem:[%s3 + $0x8] sm:$0xff]
  %v1372 = vld [vmem:[%s3 + $0x10] sm:$0xff]
  %v1373 = vld [vmem:[%s3 + $0x18] sm:$0xff]
  %v1374 = vld [vmem:[%s3 + $0x20] sm:$0xff]
  %v1375 = vld [vmem:[%s3 + $0x28] sm:$0xff]
  %v1376 = vld [vmem:[%s3 + $0x30] sm:$0xff]
  %v1377 = vld [vmem:[%s3 + $0x38] sm:$0xff]
  %v1378 = vld [vmem:[%s3 + $0x40] sm:$0xff]
  %v1379 = vld [vmem:[%s3 + $0x48] sm:$0x1]
  %v1380 = vld [vmem:[%s6] sm:$0xff]
  %vm1381 = vcmask 64512
  %v1383 = vsel %vm1381, %v1380, 0
  %1385 = vmatpush.msra.mxu0 0.0
  %1386 = vmatpush.msra.mxu0 0.0
  %1387 = vmatpush.msra.mxu0 0.0
  %1388 = vmatpush.msra.mxu0 0.0
  %1389 = vmatpush.msra.mxu0 0.0
  %1390 = vmatpush.msra.mxu0 0.0
  %1391 = vmatpush.msra.mxu0 0.0
  %1392 = vmatpush.msra.mxu0 0.0
  %1393 = vmatpush.msra.mxu0 0.0
  %1394 = vmatpush.msra.mxu0 0.0
  %1395 = vmatpush.msra.mxu0 0.0
  %1396 = vmatpush.msra.mxu0 0.0
  %1397 = vmatpush.msra.mxu0 0.0
  %1398 = vmatpush.msra.mxu0 0.0
  %1399 = vmatpush.msra.mxu0 0.0
  %1400 = vmatpush.msra.mxu0 %v1374
  %1401 = vmatmul.f32.gmra.mxu0 %v1383
  %v1402 = vpop.f32.mrf.mxu0
  %v1403 = vadd.f32 0.0, %v1402
  %1404 = vdwg.mxu0
  %v1406 = vsel %vm230, %v1369, 0
  %1408 = vmatpush.msra.mxu0 0.0
  %1409 = vmatpush.msra.mxu0 0.0
  %1410 = vmatpush.msra.mxu0 0.0
  %1411 = vmatpush.msra.mxu0 0.0
  %1412 = vmatpush.msra.mxu0 0.0
  %1413 = vmatpush.msra.mxu0 0.0
  %1414 = vmatpush.msra.mxu0 0.0
  %1415 = vmatpush.msra.mxu0 0.0
  %1416 = vmatpush.msra.mxu0 0.0
  %1417 = vmatpush.msra.mxu0 0.0
  %1418 = vmatpush.msra.mxu0 0.0
  %1419 = vmatpush.msra.mxu0 0.0
  %1420 = vmatpush.msra.mxu0 %v1373
  %1421 = vmatpush.msra.mxu0 %v1372
  %1422 = vmatpush.msra.mxu0 %v1371
  %1423 = vmatpush.msra.mxu0 %v1370
  %1424 = vmatmul.f32.gmra.mxu0 %v1406
  %v1425 = vpop.f32.mrf.mxu0
  %v1426 = vadd.f32 %v1403, %v1425
  %1427 = vdwg.mxu0
  %1428 = vmatpush.msra.mxu0 0.0
  %1429 = vmatpush.msra.mxu0 0.0
  %1430 = vmatpush.msra.mxu0 0.0
  %1431 = vmatpush.msra.mxu0 0.0
  %1432 = vmatpush.msra.mxu0 0.0
  %1433 = vmatpush.msra.mxu0 0.0
  %1434 = vmatpush.msra.mxu0 0.0
  %1435 = vmatpush.msra.mxu0 0.0
  %1436 = vmatpush.msra.mxu0 0.0
  %1437 = vmatpush.msra.mxu0 0.0
  %1438 = vmatpush.msra.mxu0 0.0
  %1439 = vmatpush.msra.mxu0 0.0
  %1440 = vmatpush.msra.mxu0 %v1378
  %1441 = vmatpush.msra.mxu0 %v1377
  %1442 = vmatpush.msra.mxu0 %v1376
  %1443 = vmatpush.msra.mxu0 %v1375
  %1444 = vmatmul.f32.gmra.mxu0 %v1305
  %v1445 = vpop.f32.mrf.mxu0
  %v1446 = vadd.f32 0.0, %v1445
  %1447 = vdwg.mxu0
  %v1448 = vadd.f32 %v1426, %v1446
  %v1449 = vperm.slane %v1379, 0
  %v1450 = vadd.f32 %v1448, %v1449
  %v1451 = vxor.u32 %v1450, 2147483648
  %v1452 = vmul.f32 %v1451, 1.442695
  %v1453 = vpow.pop %v1452
  %v1454 = vadd.f32 %v1453, 1.0
  %v1455 = vrcp.pop %v1454
  %v1456 = vmul.f32 %v1454, %v1455
  %v1457 = vsub.f32 1.0, %v1456
  %v1458 = vmul.f32 %v1455, %v1457
  %v1459 = vadd.f32 %v1455, %v1458
  %vm1460 = vweird.f32 %v1454
  %vm1461 = vweird.f32 %v1455
  %vm1462 = vmor %vm1460, %vm1461
  %v1463 = vsel %vm1462, %v1455, %v1459
  %v1464 = vand.u32 2147483647, %v1454
  %vm1465 = vcmp.eq.f32.partialorder %v1464, 8.507059e+37
  %v1466 = vand.u32 %v1454, 2147483648
  %v1467 = vor.u32 1.1754944e-38, %v1466
  %v1468 = vsel %vm1465, %v1467, %v1463
  %v1469 = vmul.f32 1.0, %v1468
  %1470 = vst [vmem:[%s7] sm:$0xff] %v1469
  // Predicated region
  $region30: #{forward.1} parent=0 // pred_check
    _
  $region31: #{forward.1} parent=0 // pred_check_branch
    %1472 = sbr.rel (0) target = $region33
  $region32: #{forward.1} parent=0 // pred_region
    _
  $region33: #{forward.1} parent=0 // pred_fallthru
    _
  // Predicated region
  $region34: #{forward.1} parent=0 // pred_check
    _
  $region35: #{forward.1} parent=0 // pred_check_branch
    %1474 = sbr.rel (0) target = $region37
  $region36: #{forward.1} parent=0 // pred_region
    _
  $region37: #{forward.1} parent=0 // pred_fallthru
    _

</llo_original>
